<compile_context>
chip_gen: v7x
topology: tpu7x:2x2x1
jax: 0.10.0
libtpu: 0.0.40
codegen_flags: <defaults>
</compile_context>

<pallas_src>
import math

import jax
import jax.numpy as jnp
from jax import lax
from jax.experimental import pallas as pl
from jax.experimental.pallas import tpu as pltpu

# ---- model config (small, deterministic) -------------------------------------
D_MODEL = 32
D_VALUE = 16
D_HIDDEN = 64          # only used by the dead FFN branch (never enters the kernel)
NHEAD = 4
HEAD_DIM = D_MODEL // NHEAD
LN_EPS = 1e-5

# rows of the packed (8, D_MODEL) vector input
_BQ, _BO, _G1, _BE1, _G2, _BE2 = range(6)


def _layer_norm(x, gamma, beta):
    mu = jnp.mean(x, axis=-1, keepdims=True)
    d = x - mu
    var = jnp.mean(d * d, axis=-1, keepdims=True)
    return d * lax.rsqrt(var + LN_EPS) * gamma + beta


# ---- kernel -------------------------------------------------------------------
def attention_kernel(q_ref, v_ref, wq_t_ref, wkv_t_ref, wo_t_ref,
                     bkv_ref, vec_ref, out_ref):
    BB, L, E = q_ref.shape              # batch-block, seq_len, d_model
    S = v_ref.shape[1]

    # Flatten the batch block into rows so the projection matmuls see BB*L / BB*S
    # rows instead of per-batch 8-row slivers.
    q2 = q_ref[...].reshape(BB * L, E)
    v2 = v_ref[...].reshape(BB * S, D_VALUE)

    # q projection (1/sqrt(head_dim) already folded into wq_t / bq in the wrapper)
    qp = (jnp.dot(q2, wq_t_ref[...], preferred_element_type=jnp.float32)
          + vec_ref[_BQ:_BQ + 1, :])
    # fused k/v projection: one (BB*S, Dv) x (Dv, 2E) matmul
    kv = (jnp.dot(v2, wkv_t_ref[...], preferred_element_type=jnp.float32)
          + bkv_ref[...])

    qp3 = qp.reshape(BB, L, E)
    kv3 = kv.reshape(BB, S, 2 * E)

    # Per-head attention; heads are folded into the output projection
    # (attn += head_h @ Wo_T[h*hd:(h+1)*hd, :]) so no concatenate is needed.
    wo_t = wo_t_ref[...]
    attn = jnp.zeros((BB * L, E), jnp.float32)
    for h in range(NHEAD):              # static, small head loop
        lo = h * HEAD_DIM
        qh = qp3[:, :, lo:lo + HEAD_DIM]                   # (BB, L, hd)
        kh = kv3[:, :, lo:lo + HEAD_DIM]                   # (BB, S, hd)
        vh = kv3[:, :, E + lo:E + lo + HEAD_DIM]           # (BB, S, hd)
        s = jnp.einsum('bld,bsd->bls', qh, kh,
                       preferred_element_type=jnp.float32)  # (BB, L, S)
        s = s - jnp.max(s, axis=-1, keepdims=True)
        p = jnp.exp(s)
        p = p * pl.reciprocal(jnp.sum(p, axis=-1, keepdims=True), approx=True)
        oh = jnp.einsum('bls,bsd->bld', p, vh,
                        preferred_element_type=jnp.float32)  # (BB, L, hd)
        attn = attn + jnp.dot(oh.reshape(BB * L, HEAD_DIM),
                              wo_t[lo:lo + HEAD_DIM, :],
                              preferred_element_type=jnp.float32)
    attn = attn + vec_ref[_BO:_BO + 1, :]

    # ---- residual + norm1 (dropout is identity in eval) -------------------------
    x = q2 + attn
    x = _layer_norm(x, vec_ref[_G1:_G1 + 1, :], vec_ref[_BE1:_BE1 + 1, :])

    # NOTE: the torch module computes q2 = linear2(relu(linear1(x))) here and then
    # DISCARDS it (the next residual adds x, not q2).  That dead FFN and its
    # weights are removed from the kernel entirely.

    # ---- residual as written in the module: q = q + dropout2(q)  -> 2*x ---------
    x = x + x
    x = _layer_norm(x, vec_ref[_G2:_G2 + 1, :], vec_ref[_BE2:_BE2 + 1, :])

    out_ref[...] = x.reshape(BB, L, E)


# ---- wrapper -------------------------------------------------------------------
def _batch_block(batch, seq_len, target_rows=256):
    """Batch elements per grid step: >=1, divides batch, ~target_rows rows/step."""
    bb = max(1, min(batch, max(1, target_rows // max(seq_len, 1))))
    while batch % bb:
        bb -= 1
    return bb


@jax.jit
def attention_forward(q_lbe, v_sbd, params):
    """q_lbe: (L, B, d_model), v_sbd: (S, B, d_value) — PyTorch seq-first layout."""
    L, B, E = q_lbe.shape
    S = v_sbd.shape[0]

    # batch-first so the kernel can run batched (leading-batch) attention einsums
    q_ble = jnp.transpose(q_lbe, (1, 0, 2))        # (B, L, E)
    v_bsd = jnp.transpose(v_sbd, (1, 0, 2))        # (B, S, Dv)

    # one-time, grid-invariant weight preprocessing
    scale = 1.0 / math.sqrt(HEAD_DIM)
    wq_t = params["wq"].T * scale                                        # (E, E)
    wkv_t = jnp.concatenate([params["wk"].T, params["wv"].T], axis=1)    # (Dv, 2E)
    wo_t = params["wo"].T                                                # (E, E)
    bkv = jnp.concatenate([params["bk"], params["bv"]], axis=1)          # (1, 2E)
    vecs = jnp.concatenate(
        [params["bq"] * scale, params["bo"],
         params["g1"], params["be1"], params["g2"], params["be2"],
         jnp.zeros((2, E), jnp.float32)], axis=0)                        # (8, E)
    # params w1/b1/w2/b2 belong to the FFN branch whose output the torch module
    # discards — intentionally NOT passed to the kernel.

    BB = _batch_block(B, L)
    grid = (B // BB,)

    full2d = lambda shape: pl.BlockSpec(shape, lambda i: (0, 0))

    out_ble = pl.pallas_call(
        attention_kernel,
        out_shape=jax.ShapeDtypeStruct((B, L, E), jnp.float32),
        grid=grid,
        in_specs=[
            pl.BlockSpec((BB, L, E), lambda i: (i, 0, 0)),          # q block
            pl.BlockSpec((BB, S, D_VALUE), lambda i: (i, 0, 0)),    # v block
            full2d((D_MODEL, D_MODEL)),                             # Wq^T (scaled)
            full2d((D_VALUE, 2 * D_MODEL)),                         # [Wk|Wv]^T
            full2d((D_MODEL, D_MODEL)),                             # Wo^T
            full2d((1, 2 * D_MODEL)),                               # [bk|bv]
            full2d((8, D_MODEL)),                                   # packed vectors
        ],
        out_specs=pl.BlockSpec((BB, L, E), lambda i: (i, 0, 0)),
        compiler_params=pltpu.CompilerParams(
            dimension_semantics=("parallel",)),
    )(q_ble, v_bsd, wq_t, wkv_t, wo_t, bkv, vecs)

    return jnp.transpose(out_ble, (1, 0, 2))       # back to (L, B, E)


# ---- deterministic parameter construction ---------------------------------------
def make_params(key):
    ks = jax.random.split(key, 6)

    def kaiming(k, shape):  # kaiming_normal_ : std = sqrt(2 / fan_in)
        return (jax.random.normal(k, shape, jnp.float32)
                * jnp.sqrt(2.0 / shape[1])).astype(jnp.float32)

    zeros = lambda n: jnp.zeros((1, n), jnp.float32)
    ones = lambda n: jnp.ones((1, n), jnp.float32)
    return dict(
        wq=kaiming(ks[0], (D_MODEL, D_MODEL)), bq=zeros(D_MODEL),
        wk=kaiming(ks[1], (D_MODEL, D_VALUE)), bk=zeros(D_MODEL),
        wv=kaiming(ks[2], (D_MODEL, D_VALUE)), bv=zeros(D_MODEL),
        wo=kaiming(ks[3], (D_MODEL, D_MODEL)), bo=zeros(D_MODEL),
        g1=ones(D_MODEL), be1=zeros(D_MODEL),
        g2=ones(D_MODEL), be2=zeros(D_MODEL),
        # FFN params exist in the torch module but its output is discarded;
        # kept here for module fidelity, never used by the forward pass.
        w1=kaiming(ks[4], (D_HIDDEN, D_MODEL)), b1=zeros(D_HIDDEN),
        w2=kaiming(ks[5], (D_MODEL, D_HIDDEN)), b2=zeros(D_MODEL),
    )


if __name__ == "__main__":
    L, S, B = 8, 8, 2
    key = jax.random.PRNGKey(0)
    kq, kv_, kp = jax.random.split(key, 3)

    q = jax.random.normal(kq, (L, B, D_MODEL), jnp.float32)   # (seq, batch, d_model)
    v = jax.random.normal(kv_, (S, B, D_VALUE), jnp.float32)  # (seq, batch, d_value)
    params = make_params(kp)

    out = attention_forward(q, v, params)
    jax.block_until_ready(out)
    assert out.shape == (L, B, D_MODEL)
    print("KERNEL_OK")
</pallas_src>

<mosaic_0001>
module attributes {stable_mosaic.version = 11 : i64} {
  func.func @attention_kernel(%arg0: i32, %arg1: memref<2x8x32xf32, #tpu.memory_space<vmem>>, %arg2: memref<2x8x16xf32, #tpu.memory_space<vmem>>, %arg3: memref<32x32xf32, #tpu.memory_space<vmem>>, %arg4: memref<16x64xf32, #tpu.memory_space<vmem>>, %arg5: memref<32x32xf32, #tpu.memory_space<vmem>>, %arg6: memref<1x64xf32, #tpu.memory_space<vmem>>, %arg7: memref<8x32xf32, #tpu.memory_space<vmem>>, %arg8: memref<2x8x32xf32, #tpu.memory_space<vmem>>) attributes {dimension_semantics = [#tpu.dimension_semantics<parallel>], iteration_bounds = array<i64: 1>, scalar_prefetch = 0 : i64, scratch_operands = 0 : i64, tpu.core_type = #tpu.core_type<tc>, window_params = [{transform_indices = @transform_0, window_bounds = array<i64: 2, 8, 32>}, {transform_indices = @transform_1, window_bounds = array<i64: 2, 8, 16>}, {pipeline_mode = #tpu.pipeline_mode<synchronous>, transform_indices = @transform_2, window_bounds = array<i64: 32, 32>}, {pipeline_mode = #tpu.pipeline_mode<synchronous>, transform_indices = @transform_3, window_bounds = array<i64: 16, 64>}, {pipeline_mode = #tpu.pipeline_mode<synchronous>, transform_indices = @transform_4, window_bounds = array<i64: 32, 32>}, {pipeline_mode = #tpu.pipeline_mode<synchronous>, transform_indices = @transform_5, window_bounds = array<i64: 1, 64>}, {pipeline_mode = #tpu.pipeline_mode<synchronous>, transform_indices = @transform_6, window_bounds = array<i64: 8, 32>}, {transform_indices = @transform_7, window_bounds = array<i64: 2, 8, 32>}]} {
    %c0 = arith.constant 0 : index
    %c0_0 = arith.constant 0 : index
    %c0_1 = arith.constant 0 : index
    %0 = vector.load %arg1[%c0, %c0_0, %c0_1] : memref<2x8x32xf32, #tpu.memory_space<vmem>>, vector<2x8x32xf32>
    %1 = vector.shape_cast %0 : vector<2x8x32xf32> to vector<16x32xf32>
    %c0_2 = arith.constant 0 : index
    %c0_3 = arith.constant 0 : index
    %c0_4 = arith.constant 0 : index
    %2 = vector.load %arg2[%c0_2, %c0_3, %c0_4] : memref<2x8x16xf32, #tpu.memory_space<vmem>>, vector<2x8x16xf32>
    %3 = vector.shape_cast %2 : vector<2x8x16xf32> to vector<16x16xf32>
    %c0_5 = arith.constant 0 : index
    %c0_6 = arith.constant 0 : index
    %4 = vector.load %arg3[%c0_5, %c0_6] : memref<32x32xf32, #tpu.memory_space<vmem>>, vector<32x32xf32>
    %cst = arith.constant dense<0.000000e+00> : vector<16x32xf32>
    %5 = tpu.matmul %1, %4, %cst {dimension_numbers = #tpu.dot_dimension_numbers<[1], [0], [0], [1], [0, 0, 1, 1], [], []>} : vector<16x32xf32>, vector<32x32xf32>, vector<16x32xf32> -> vector<16x32xf32>
    %c0_7 = arith.constant 0 : index
    %c0_8 = arith.constant 0 : index
    %6 = vector.load %arg7[%c0_7, %c0_8] : memref<8x32xf32, #tpu.memory_space<vmem>>, vector<1x32xf32>
    %7 = vector.broadcast %6 : vector<1x32xf32> to vector<16x32xf32>
    %8 = arith.addf %5, %7 : vector<16x32xf32>
    %c0_9 = arith.constant 0 : index
    %c0_10 = arith.constant 0 : index
    %9 = vector.load %arg4[%c0_9, %c0_10] : memref<16x64xf32, #tpu.memory_space<vmem>>, vector<16x64xf32>
    %cst_11 = arith.constant dense<0.000000e+00> : vector<16x64xf32>
    %10 = tpu.matmul %3, %9, %cst_11 {dimension_numbers = #tpu.dot_dimension_numbers<[1], [0], [0], [1], [0, 0, 1, 1], [], []>} : vector<16x16xf32>, vector<16x64xf32>, vector<16x64xf32> -> vector<16x64xf32>
    %c0_12 = arith.constant 0 : index
    %c0_13 = arith.constant 0 : index
    %11 = vector.load %arg6[%c0_12, %c0_13] : memref<1x64xf32, #tpu.memory_space<vmem>>, vector<1x64xf32>
    %12 = vector.broadcast %11 : vector<1x64xf32> to vector<16x64xf32>
    %13 = arith.addf %10, %12 : vector<16x64xf32>
    %14 = vector.shape_cast %8 : vector<16x32xf32> to vector<2x8x32xf32>
    %15 = vector.shape_cast %13 : vector<16x64xf32> to vector<2x8x64xf32>
    %c0_14 = arith.constant 0 : index
    %c0_15 = arith.constant 0 : index
    %16 = vector.load %arg5[%c0_14, %c0_15] : memref<32x32xf32, #tpu.memory_space<vmem>>, vector<32x32xf32>
    %cst_16 = arith.constant 0.000000e+00 : f32
    %17 = vector.broadcast %cst_16 : f32 to vector<16x32xf32>
    %18 = vector.extract_strided_slice %14 {offsets = [0, 0, 0], sizes = [2, 8, 8], strides = [1, 1, 1]} : vector<2x8x32xf32> to vector<2x8x8xf32>
    %19 = vector.extract_strided_slice %15 {offsets = [0, 0, 0], sizes = [2, 8, 8], strides = [1, 1, 1]} : vector<2x8x64xf32> to vector<2x8x8xf32>
    %20 = vector.extract_strided_slice %15 {offsets = [0, 0, 32], sizes = [2, 8, 8], strides = [1, 1, 1]} : vector<2x8x64xf32> to vector<2x8x8xf32>
    "tpu.trace_start"() <{level = 10 : i32, message = "bld,bsd->bls"}> : () -> ()
    %cst_17 = arith.constant dense<0.000000e+00> : vector<2x8x8xf32>
    %21 = tpu.matmul %18, %19, %cst_17 {dimension_numbers = #tpu.dot_dimension_numbers<[2], [2], [1], [1], [0, 0, 0, 1, 1, 1], [0], [0]>} : vector<2x8x8xf32>, vector<2x8x8xf32>, vector<2x8x8xf32> -> vector<2x8x8xf32>
    "tpu.trace_stop"() : () -> ()
    %cst_18 = arith.constant dense<0xFF800000> : vector<2x8xf32>
    %22 = vector.multi_reduction <maximumf>, %21, %cst_18 [2] : vector<2x8x8xf32> to vector<2x8xf32>
    %23 = vector.shape_cast %22 : vector<2x8xf32> to vector<2x8x1xf32>
    %24 = vector.broadcast %23 : vector<2x8x1xf32> to vector<2x8x8xf32>
    %25 = arith.subf %21, %24 : vector<2x8x8xf32>
    %26 = math.exp %25 : vector<2x8x8xf32>
    %cst_19 = arith.constant dense<0.000000e+00> : vector<2x8xf32>
    %27 = vector.multi_reduction <add>, %26, %cst_19 [2] : vector<2x8x8xf32> to vector<2x8xf32>
    %28 = vector.shape_cast %27 : vector<2x8xf32> to vector<2x8x1xf32>
    %29 = tpu.reciprocal %28 {approx = true} : vector<2x8x1xf32> -> vector<2x8x1xf32>
    %30 = vector.broadcast %29 : vector<2x8x1xf32> to vector<2x8x8xf32>
    %31 = arith.mulf %26, %30 : vector<2x8x8xf32>
    "tpu.trace_start"() <{level = 10 : i32, message = "bls,bsd->bld"}> : () -> ()
    %cst_20 = arith.constant dense<0.000000e+00> : vector<2x8x8xf32>
    %32 = tpu.matmul %31, %20, %cst_20 {dimension_numbers = #tpu.dot_dimension_numbers<[2], [1], [1], [2], [0, 0, 0, 1, 1, 2], [0], [0]>} : vector<2x8x8xf32>, vector<2x8x8xf32>, vector<2x8x8xf32> -> vector<2x8x8xf32>
    "tpu.trace_stop"() : () -> ()
    %33 = vector.shape_cast %32 : vector<2x8x8xf32> to vector<16x8xf32>
    %34 = vector.extract_strided_slice %16 {offsets = [0, 0], sizes = [8, 32], strides = [1, 1]} : vector<32x32xf32> to vector<8x32xf32>
    %cst_21 = arith.constant dense<0.000000e+00> : vector<16x32xf32>
    %35 = tpu.matmul %33, %34, %cst_21 {dimension_numbers = #tpu.dot_dimension_numbers<[1], [0], [0], [1], [0, 0, 1, 1], [], []>} : vector<16x8xf32>, vector<8x32xf32>, vector<16x32xf32> -> vector<16x32xf32>
    %36 = arith.addf %17, %35 : vector<16x32xf32>
    %37 = vector.extract_strided_slice %14 {offsets = [0, 0, 8], sizes = [2, 8, 8], strides = [1, 1, 1]} : vector<2x8x32xf32> to vector<2x8x8xf32>
    %38 = vector.extract_strided_slice %15 {offsets = [0, 0, 8], sizes = [2, 8, 8], strides = [1, 1, 1]} : vector<2x8x64xf32> to vector<2x8x8xf32>
    %39 = vector.extract_strided_slice %15 {offsets = [0, 0, 40], sizes = [2, 8, 8], strides = [1, 1, 1]} : vector<2x8x64xf32> to vector<2x8x8xf32>
    "tpu.trace_start"() <{level = 10 : i32, message = "bld,bsd->bls"}> : () -> ()
    %cst_22 = arith.constant dense<0.000000e+00> : vector<2x8x8xf32>
    %40 = tpu.matmul %37, %38, %cst_22 {dimension_numbers = #tpu.dot_dimension_numbers<[2], [2], [1], [1], [0, 0, 0, 1, 1, 1], [0], [0]>} : vector<2x8x8xf32>, vector<2x8x8xf32>, vector<2x8x8xf32> -> vector<2x8x8xf32>
    "tpu.trace_stop"() : () -> ()
    %cst_23 = arith.constant dense<0xFF800000> : vector<2x8xf32>
    %41 = vector.multi_reduction <maximumf>, %40, %cst_23 [2] : vector<2x8x8xf32> to vector<2x8xf32>
    %42 = vector.shape_cast %41 : vector<2x8xf32> to vector<2x8x1xf32>
    %43 = vector.broadcast %42 : vector<2x8x1xf32> to vector<2x8x8xf32>
    %44 = arith.subf %40, %43 : vector<2x8x8xf32>
    %45 = math.exp %44 : vector<2x8x8xf32>
    %cst_24 = arith.constant dense<0.000000e+00> : vector<2x8xf32>
    %46 = vector.multi_reduction <add>, %45, %cst_24 [2] : vector<2x8x8xf32> to vector<2x8xf32>
    %47 = vector.shape_cast %46 : vector<2x8xf32> to vector<2x8x1xf32>
    %48 = tpu.reciprocal %47 {approx = true} : vector<2x8x1xf32> -> vector<2x8x1xf32>
    %49 = vector.broadcast %48 : vector<2x8x1xf32> to vector<2x8x8xf32>
    %50 = arith.mulf %45, %49 : vector<2x8x8xf32>
    "tpu.trace_start"() <{level = 10 : i32, message = "bls,bsd->bld"}> : () -> ()
    %cst_25 = arith.constant dense<0.000000e+00> : vector<2x8x8xf32>
    %51 = tpu.matmul %50, %39, %cst_25 {dimension_numbers = #tpu.dot_dimension_numbers<[2], [1], [1], [2], [0, 0, 0, 1, 1, 2], [0], [0]>} : vector<2x8x8xf32>, vector<2x8x8xf32>, vector<2x8x8xf32> -> vector<2x8x8xf32>
    "tpu.trace_stop"() : () -> ()
    %52 = vector.shape_cast %51 : vector<2x8x8xf32> to vector<16x8xf32>
    %53 = vector.extract_strided_slice %16 {offsets = [8, 0], sizes = [8, 32], strides = [1, 1]} : vector<32x32xf32> to vector<8x32xf32>
    %cst_26 = arith.constant dense<0.000000e+00> : vector<16x32xf32>
    %54 = tpu.matmul %52, %53, %cst_26 {dimension_numbers = #tpu.dot_dimension_numbers<[1], [0], [0], [1], [0, 0, 1, 1], [], []>} : vector<16x8xf32>, vector<8x32xf32>, vector<16x32xf32> -> vector<16x32xf32>
    %55 = arith.addf %36, %54 : vector<16x32xf32>
    %56 = vector.extract_strided_slice %14 {offsets = [0, 0, 16], sizes = [2, 8, 8], strides = [1, 1, 1]} : vector<2x8x32xf32> to vector<2x8x8xf32>
    %57 = vector.extract_strided_slice %15 {offsets = [0, 0, 16], sizes = [2, 8, 8], strides = [1, 1, 1]} : vector<2x8x64xf32> to vector<2x8x8xf32>
    %58 = vector.extract_strided_slice %15 {offsets = [0, 0, 48], sizes = [2, 8, 8], strides = [1, 1, 1]} : vector<2x8x64xf32> to vector<2x8x8xf32>
    "tpu.trace_start"() <{level = 10 : i32, message = "bld,bsd->bls"}> : () -> ()
    %cst_27 = arith.constant dense<0.000000e+00> : vector<2x8x8xf32>
    %59 = tpu.matmul %56, %57, %cst_27 {dimension_numbers = #tpu.dot_dimension_numbers<[2], [2], [1], [1], [0, 0, 0, 1, 1, 1], [0], [0]>} : vector<2x8x8xf32>, vector<2x8x8xf32>, vector<2x8x8xf32> -> vector<2x8x8xf32>
    "tpu.trace_stop"() : () -> ()
    %cst_28 = arith.constant dense<0xFF800000> : vector<2x8xf32>
    %60 = vector.multi_reduction <maximumf>, %59, %cst_28 [2] : vector<2x8x8xf32> to vector<2x8xf32>
    %61 = vector.shape_cast %60 : vector<2x8xf32> to vector<2x8x1xf32>
    %62 = vector.broadcast %61 : vector<2x8x1xf32> to vector<2x8x8xf32>
    %63 = arith.subf %59, %62 : vector<2x8x8xf32>
    %64 = math.exp %63 : vector<2x8x8xf32>
    %cst_29 = arith.constant dense<0.000000e+00> : vector<2x8xf32>
    %65 = vector.multi_reduction <add>, %64, %cst_29 [2] : vector<2x8x8xf32> to vector<2x8xf32>
    %66 = vector.shape_cast %65 : vector<2x8xf32> to vector<2x8x1xf32>
    %67 = tpu.reciprocal %66 {approx = true} : vector<2x8x1xf32> -> vector<2x8x1xf32>
    %68 = vector.broadcast %67 : vector<2x8x1xf32> to vector<2x8x8xf32>
    %69 = arith.mulf %64, %68 : vector<2x8x8xf32>
    "tpu.trace_start"() <{level = 10 : i32, message = "bls,bsd->bld"}> : () -> ()
    %cst_30 = arith.constant dense<0.000000e+00> : vector<2x8x8xf32>
    %70 = tpu.matmul %69, %58, %cst_30 {dimension_numbers = #tpu.dot_dimension_numbers<[2], [1], [1], [2], [0, 0, 0, 1, 1, 2], [0], [0]>} : vector<2x8x8xf32>, vector<2x8x8xf32>, vector<2x8x8xf32> -> vector<2x8x8xf32>
    "tpu.trace_stop"() : () -> ()
    %71 = vector.shape_cast %70 : vector<2x8x8xf32> to vector<16x8xf32>
    %72 = vector.extract_strided_slice %16 {offsets = [16, 0], sizes = [8, 32], strides = [1, 1]} : vector<32x32xf32> to vector<8x32xf32>
    %cst_31 = arith.constant dense<0.000000e+00> : vector<16x32xf32>
    %73 = tpu.matmul %71, %72, %cst_31 {dimension_numbers = #tpu.dot_dimension_numbers<[1], [0], [0], [1], [0, 0, 1, 1], [], []>} : vector<16x8xf32>, vector<8x32xf32>, vector<16x32xf32> -> vector<16x32xf32>
    %74 = arith.addf %55, %73 : vector<16x32xf32>
    %75 = vector.extract_strided_slice %14 {offsets = [0, 0, 24], sizes = [2, 8, 8], strides = [1, 1, 1]} : vector<2x8x32xf32> to vector<2x8x8xf32>
    %76 = vector.extract_strided_slice %15 {offsets = [0, 0, 24], sizes = [2, 8, 8], strides = [1, 1, 1]} : vector<2x8x64xf32> to vector<2x8x8xf32>
    %77 = vector.extract_strided_slice %15 {offsets = [0, 0, 56], sizes = [2, 8, 8], strides = [1, 1, 1]} : vector<2x8x64xf32> to vector<2x8x8xf32>
    "tpu.trace_start"() <{level = 10 : i32, message = "bld,bsd->bls"}> : () -> ()
    %cst_32 = arith.constant dense<0.000000e+00> : vector<2x8x8xf32>
    %78 = tpu.matmul %75, %76, %cst_32 {dimension_numbers = #tpu.dot_dimension_numbers<[2], [2], [1], [1], [0, 0, 0, 1, 1, 1], [0], [0]>} : vector<2x8x8xf32>, vector<2x8x8xf32>, vector<2x8x8xf32> -> vector<2x8x8xf32>
    "tpu.trace_stop"() : () -> ()
    %cst_33 = arith.constant dense<0xFF800000> : vector<2x8xf32>
    %79 = vector.multi_reduction <maximumf>, %78, %cst_33 [2] : vector<2x8x8xf32> to vector<2x8xf32>
    %80 = vector.shape_cast %79 : vector<2x8xf32> to vector<2x8x1xf32>
    %81 = vector.broadcast %80 : vector<2x8x1xf32> to vector<2x8x8xf32>
    %82 = arith.subf %78, %81 : vector<2x8x8xf32>
    %83 = math.exp %82 : vector<2x8x8xf32>
    %cst_34 = arith.constant dense<0.000000e+00> : vector<2x8xf32>
    %84 = vector.multi_reduction <add>, %83, %cst_34 [2] : vector<2x8x8xf32> to vector<2x8xf32>
    %85 = vector.shape_cast %84 : vector<2x8xf32> to vector<2x8x1xf32>
    %86 = tpu.reciprocal %85 {approx = true} : vector<2x8x1xf32> -> vector<2x8x1xf32>
    %87 = vector.broadcast %86 : vector<2x8x1xf32> to vector<2x8x8xf32>
    %88 = arith.mulf %83, %87 : vector<2x8x8xf32>
    "tpu.trace_start"() <{level = 10 : i32, message = "bls,bsd->bld"}> : () -> ()
    %cst_35 = arith.constant dense<0.000000e+00> : vector<2x8x8xf32>
    %89 = tpu.matmul %88, %77, %cst_35 {dimension_numbers = #tpu.dot_dimension_numbers<[2], [1], [1], [2], [0, 0, 0, 1, 1, 2], [0], [0]>} : vector<2x8x8xf32>, vector<2x8x8xf32>, vector<2x8x8xf32> -> vector<2x8x8xf32>
    "tpu.trace_stop"() : () -> ()
    %90 = vector.shape_cast %89 : vector<2x8x8xf32> to vector<16x8xf32>
    %91 = vector.extract_strided_slice %16 {offsets = [24, 0], sizes = [8, 32], strides = [1, 1]} : vector<32x32xf32> to vector<8x32xf32>
    %cst_36 = arith.constant dense<0.000000e+00> : vector<16x32xf32>
    %92 = tpu.matmul %90, %91, %cst_36 {dimension_numbers = #tpu.dot_dimension_numbers<[1], [0], [0], [1], [0, 0, 1, 1], [], []>} : vector<16x8xf32>, vector<8x32xf32>, vector<16x32xf32> -> vector<16x32xf32>
    %93 = arith.addf %74, %92 : vector<16x32xf32>
    %c1 = arith.constant 1 : index
    %c0_37 = arith.constant 0 : index
    %94 = vector.load %arg7[%c1, %c0_37] : memref<8x32xf32, #tpu.memory_space<vmem>>, vector<1x32xf32>
    %95 = vector.broadcast %94 : vector<1x32xf32> to vector<16x32xf32>
    %96 = arith.addf %93, %95 : vector<16x32xf32>
    %97 = arith.addf %1, %96 : vector<16x32xf32>
    %c2 = arith.constant 2 : index
    %c0_38 = arith.constant 0 : index
    %98 = vector.load %arg7[%c2, %c0_38] : memref<8x32xf32, #tpu.memory_space<vmem>>, vector<1x32xf32>
    %c3 = arith.constant 3 : index
    %c0_39 = arith.constant 0 : index
    %99 = vector.load %arg7[%c3, %c0_39] : memref<8x32xf32, #tpu.memory_space<vmem>>, vector<1x32xf32>
    %cst_40 = arith.constant dense<0.000000e+00> : vector<16xf32>
    %100 = vector.multi_reduction <add>, %97, %cst_40 [1] : vector<16x32xf32> to vector<16xf32>
    %101 = vector.shape_cast %100 : vector<16xf32> to vector<16x1xf32>
    %cst_41 = arith.constant 3.200000e+01 : f32
    %102 = vector.broadcast %cst_41 : f32 to vector<16x1xf32>
    %103 = arith.divf %101, %102 : vector<16x1xf32>
    %104 = vector.broadcast %103 : vector<16x1xf32> to vector<16x32xf32>
    %105 = arith.subf %97, %104 : vector<16x32xf32>
    %106 = arith.mulf %105, %105 : vector<16x32xf32>
    %cst_42 = arith.constant dense<0.000000e+00> : vector<16xf32>
    %107 = vector.multi_reduction <add>, %106, %cst_42 [1] : vector<16x32xf32> to vector<16xf32>
    %108 = vector.shape_cast %107 : vector<16xf32> to vector<16x1xf32>
    %cst_43 = arith.constant 3.200000e+01 : f32
    %109 = vector.broadcast %cst_43 : f32 to vector<16x1xf32>
    %110 = arith.divf %108, %109 : vector<16x1xf32>
    %cst_44 = arith.constant 9.99999974E-6 : f32
    %111 = vector.broadcast %cst_44 : f32 to vector<16x1xf32>
    %112 = arith.addf %110, %111 : vector<16x1xf32>
    %113 = math.rsqrt %112 : vector<16x1xf32>
    %114 = vector.broadcast %113 : vector<16x1xf32> to vector<16x32xf32>
    %115 = arith.mulf %105, %114 : vector<16x32xf32>
    %116 = vector.broadcast %98 : vector<1x32xf32> to vector<16x32xf32>
    %117 = arith.mulf %115, %116 : vector<16x32xf32>
    %118 = vector.broadcast %99 : vector<1x32xf32> to vector<16x32xf32>
    %119 = arith.addf %117, %118 : vector<16x32xf32>
    %120 = arith.addf %119, %119 : vector<16x32xf32>
    %c4 = arith.constant 4 : index
    %c0_45 = arith.constant 0 : index
    %121 = vector.load %arg7[%c4, %c0_45] : memref<8x32xf32, #tpu.memory_space<vmem>>, vector<1x32xf32>
    %c5 = arith.constant 5 : index
    %c0_46 = arith.constant 0 : index
    %122 = vector.load %arg7[%c5, %c0_46] : memref<8x32xf32, #tpu.memory_space<vmem>>, vector<1x32xf32>
    %cst_47 = arith.constant dense<0.000000e+00> : vector<16xf32>
    %123 = vector.multi_reduction <add>, %120, %cst_47 [1] : vector<16x32xf32> to vector<16xf32>
    %124 = vector.shape_cast %123 : vector<16xf32> to vector<16x1xf32>
    %cst_48 = arith.constant 3.200000e+01 : f32
    %125 = vector.broadcast %cst_48 : f32 to vector<16x1xf32>
    %126 = arith.divf %124, %125 : vector<16x1xf32>
    %127 = vector.broadcast %126 : vector<16x1xf32> to vector<16x32xf32>
    %128 = arith.subf %120, %127 : vector<16x32xf32>
    %129 = arith.mulf %128, %128 : vector<16x32xf32>
    %cst_49 = arith.constant dense<0.000000e+00> : vector<16xf32>
    %130 = vector.multi_reduction <add>, %129, %cst_49 [1] : vector<16x32xf32> to vector<16xf32>
    %131 = vector.shape_cast %130 : vector<16xf32> to vector<16x1xf32>
    %cst_50 = arith.constant 3.200000e+01 : f32
    %132 = vector.broadcast %cst_50 : f32 to vector<16x1xf32>
    %133 = arith.divf %131, %132 : vector<16x1xf32>
    %cst_51 = arith.constant 9.99999974E-6 : f32
    %134 = vector.broadcast %cst_51 : f32 to vector<16x1xf32>
    %135 = arith.addf %133, %134 : vector<16x1xf32>
    %136 = math.rsqrt %135 : vector<16x1xf32>
    %137 = vector.broadcast %136 : vector<16x1xf32> to vector<16x32xf32>
    %138 = arith.mulf %128, %137 : vector<16x32xf32>
    %139 = vector.broadcast %121 : vector<1x32xf32> to vector<16x32xf32>
    %140 = arith.mulf %138, %139 : vector<16x32xf32>
    %141 = vector.broadcast %122 : vector<1x32xf32> to vector<16x32xf32>
    %142 = arith.addf %140, %141 : vector<16x32xf32>
    %143 = vector.shape_cast %142 : vector<16x32xf32> to vector<2x8x32xf32>
    %c0_52 = arith.constant 0 : index
    %c0_53 = arith.constant 0 : index
    %c0_54 = arith.constant 0 : index
    %144 = vector.load %arg8[%c0_52, %c0_53, %c0_54] : memref<2x8x32xf32, #tpu.memory_space<vmem>>, vector<2x8x32xf32>
    tpu.vector_store %arg8[%c0_52, %c0_53, %c0_54], %143 {strides = array<i32>} : memref<2x8x32xf32, #tpu.memory_space<vmem>>, vector<2x8x32xf32>,
    return
  }
  func.func @transform_0(%arg0: i32) -> (i32, i32, i32) {
    %c0_i32 = arith.constant 0 : i32
    %c0_i32_0 = arith.constant 0 : i32
    %c0_i32_1 = arith.constant 0 : i32
    return %arg0, %c0_i32, %c0_i32_0 : i32, i32, i32
  }
  func.func @transform_1(%arg0: i32) -> (i32, i32, i32) {
    %c0_i32 = arith.constant 0 : i32
    %c0_i32_0 = arith.constant 0 : i32
    %c0_i32_1 = arith.constant 0 : i32
    return %arg0, %c0_i32, %c0_i32_0 : i32, i32, i32
  }
  func.func @transform_2(%arg0: i32) -> (i32, i32) {
    %c0_i32 = arith.constant 0 : i32
    %c0_i32_0 = arith.constant 0 : i32
    %c0_i32_1 = arith.constant 0 : i32
    return %c0_i32, %c0_i32_0 : i32, i32
  }
  func.func @transform_3(%arg0: i32) -> (i32, i32) {
    %c0_i32 = arith.constant 0 : i32
    %c0_i32_0 = arith.constant 0 : i32
    %c0_i32_1 = arith.constant 0 : i32
    return %c0_i32, %c0_i32_0 : i32, i32
  }
  func.func @transform_4(%arg0: i32) -> (i32, i32) {
    %c0_i32 = arith.constant 0 : i32
    %c0_i32_0 = arith.constant 0 : i32
    %c0_i32_1 = arith.constant 0 : i32
    return %c0_i32, %c0_i32_0 : i32, i32
  }
  func.func @transform_5(%arg0: i32) -> (i32, i32) {
    %c0_i32 = arith.constant 0 : i32
    %c0_i32_0 = arith.constant 0 : i32
    %c0_i32_1 = arith.constant 0 : i32
    return %c0_i32, %c0_i32_0 : i32, i32
  }
  func.func @transform_6(%arg0: i32) -> (i32, i32) {
    %c0_i32 = arith.constant 0 : i32
    %c0_i32_0 = arith.constant 0 : i32
    %c0_i32_1 = arith.constant 0 : i32
    return %c0_i32, %c0_i32_0 : i32, i32
  }
  func.func @transform_7(%arg0: i32) -> (i32, i32, i32) {
    %c0_i32 = arith.constant 0 : i32
    %c0_i32_0 = arith.constant 0 : i32
    %c0_i32_1 = arith.constant 0 : i32
    return %arg0, %c0_i32, %c0_i32_0 : i32, i32, i32
  }
}

</mosaic_0001>

<llo_original>
// kernel: attention_forward.1
$region0: #{attention_forward.1}
  #allocation0 [shape = 'u32[]', space=smem, size = 0x4, offset = 0x4, fixed_abs, tag = 'smem constant byte address 0x4 - core index']
  #allocation1 [shape = 'u32[144,128]{1,0:T(1,128)}', space=vmem, size = 0x12000, scoped, tag = 'internal scratch']
  %s0 = inlined_call_operand.vmem [shape: f32[2,8,32], index: 0, kind: input, shape index: {}]
  %s1 = inlined_call_operand.vmem [shape: f32[2,8,16], index: 1, kind: input, shape index: {}]
  %s2 = inlined_call_operand.vmem [shape: f32[32,32], index: 2, kind: input, shape index: {}]
  %s3 = inlined_call_operand.vmem [shape: f32[16,64], index: 3, kind: input, shape index: {}]
  %s4 = inlined_call_operand.vmem [shape: f32[32,32], index: 4, kind: input, shape index: {}]
  %s5 = inlined_call_operand.vmem [shape: f32[1,64], index: 5, kind: input, shape index: {}]
  %s6 = inlined_call_operand.vmem [shape: f32[8,32], index: 6, kind: input, shape index: {}]
  %s7 = inlined_call_operand.vmem [shape: f32[2,8,32], index: 7, kind: output, shape index: {}]
  %s8 = sld [smem:[#allocation0]]
  $region38: #{attention_forward.1} parent=0
    _
  %s10 = ssub.s32 1, %s8
  %s11 = scalar_select 0, %s10, %s8
  // Predicated region
  $region2: #{attention_forward.1} parent=0 // pred_check
    _
  $region3: #{attention_forward.1} parent=0 // pred_check_branch
    %13 = sbr.rel (0) target = $region5
  $region4: #{attention_forward.1} parent=0 // pred_region
    _
  $region5: #{attention_forward.1} parent=0 // pred_fallthru
    _
  // Predicated region
  $region6: #{attention_forward.1} parent=0 // pred_check
    _
  $region7: #{attention_forward.1} parent=0 // pred_check_branch
    %15 = sbr.rel (0) target = $region9
  $region8: #{attention_forward.1} parent=0 // pred_region
    _
  $region9: #{attention_forward.1} parent=0 // pred_fallthru
    _
  // Predicated region
  $region10: #{attention_forward.1} parent=0 // pred_check
    _
  $region11: #{attention_forward.1} parent=0 // pred_check_branch
    %17 = sbr.rel (0) target = $region13
  $region12: #{attention_forward.1} parent=0 // pred_region
    _
  $region13: #{attention_forward.1} parent=0 // pred_fallthru
    _
  // Predicated region
  $region14: #{attention_forward.1} parent=0 // pred_check
    _
  $region15: #{attention_forward.1} parent=0 // pred_check_branch
    %19 = sbr.rel (0) target = $region17
  $region16: #{attention_forward.1} parent=0 // pred_region
    _
  $region17: #{attention_forward.1} parent=0 // pred_fallthru
    _
  // Predicated region
  $region18: #{attention_forward.1} parent=0 // pred_check
    _
  $region19: #{attention_forward.1} parent=0 // pred_check_branch
    %21 = sbr.rel (0) target = $region21
  $region20: #{attention_forward.1} parent=0 // pred_region
    _
  $region21: #{attention_forward.1} parent=0 // pred_fallthru
    _
  // Predicated region
  $region22: #{attention_forward.1} parent=0 // pred_check
    _
  $region23: #{attention_forward.1} parent=0 // pred_check_branch
    %23 = sbr.rel (0) target = $region25
  $region24: #{attention_forward.1} parent=0 // pred_region
    _
  $region25: #{attention_forward.1} parent=0 // pred_fallthru
    _
  // Predicated region
  $region26: #{attention_forward.1} parent=0 // pred_check
    _
  $region27: #{attention_forward.1} parent=0 // pred_check_branch
    %25 = sbr.rel (0) target = $region29
  $region28: #{attention_forward.1} parent=0 // pred_region
    _
  $region29: #{attention_forward.1} parent=0 // pred_fallthru
    _
  %v26 = vld [vmem:[%s0] sm:$0xff]
  %v27 = vld [vmem:[%s0 + $0x8] sm:$0xff]
  %v28 = vld [vmem:[%s1] sm:$0xff]
  %v29 = vld [vmem:[%s1 + $0x8] sm:$0xff]
  %v30 = vld [vmem:[%s2] sm:$0xff]
  %v31 = vld [vmem:[%s2 + $0x8] sm:$0xff]
  %v32 = vld [vmem:[%s2 + $0x10] sm:$0xff]
  %v33 = vld [vmem:[%s2 + $0x18] sm:$0xff]
  %v34 = vld [vmem:[%s6] sm:$0x1]
  %v35 = vlaneseq
  %v36 = vshrl.u32 %v35, 7
  %v37 = vsub.s32 0, %v36
  %v38 = vrot.slane %v34, %v37
  %vm39 = vcmask 261120
  %v41 = vsel %vm39, %v26, 0
  %v44 = vsel %vm39, %v27, 0
  %46 = vmatprep.subr.mxu0 0.0
  %47 = vmatpush1.msra.mxu0 %v30
  %48 = vmatprep.subr.mxu0 0.0
  %49 = vmatpush1.msra.mxu0 %v31
  %50 = vmatprep.subr.mxu0 0.0
  %51 = vmatpush1.msra.mxu0 %v32
  %52 = vmatprep.subr.mxu0 0.0
  %53 = vmatpush1.msra.mxu0 %v33
  %54 = vmatprep.subr.mxu0 0.0
  %55 = vmatpush1.msra.mxu0 0.0
  %56 = vmatprep.subr.mxu0 0.0
  %57 = vmatpush1.msra.mxu0 0.0
  %58 = vmatprep.subr.mxu0 0.0
  %59 = vmatpush1.msra.mxu0 0.0
  %60 = vmatprep.subr.mxu0 0.0
  %61 = vmatpush1.msra.mxu0 0.0
  %62 = vmatprep.subr.mxu0 0.0
  %63 = vmatpush1.msra.mxu0 0.0
  %64 = vmatprep.subr.mxu0 0.0
  %65 = vmatpush1.msra.mxu0 0.0
  %66 = vmatprep.subr.mxu0 0.0
  %67 = vmatpush1.msra.mxu0 0.0
  %68 = vmatprep.subr.mxu0 0.0
  %69 = vmatpush1.msra.mxu0 0.0
  %70 = vmatprep.subr.mxu0 0.0
  %71 = vmatpush1.msra.mxu0 0.0
  %72 = vmatprep.subr.mxu0 0.0
  %73 = vmatpush1.msra.mxu0 0.0
  %74 = vmatprep.subr.mxu0 0.0
  %75 = vmatpush1.msra.mxu0 0.0
  %76 = vmatprep.subr.mxu0 0.0
  %77 = vmatpush1.msra.mxu0 0.0
  %78 = vmatprep.subr.mxu0 0.0
  %79 = vmatpush1.msra.mxu0 0.0
  %80 = vmatprep.subr.mxu0 0.0
  %81 = vmatpush1.msra.mxu0 0.0
  %82 = vmatprep.subr.mxu0 0.0
  %83 = vmatpush1.msra.mxu0 0.0
  %84 = vmatprep.subr.mxu0 0.0
  %85 = vmatpush1.msra.mxu0 0.0
  %86 = vmatprep.subr.mxu0 0.0
  %87 = vmatpush1.msra.mxu0 0.0
  %88 = vmatprep.subr.mxu0 0.0
  %89 = vmatpush1.msra.mxu0 0.0
  %90 = vmatprep.subr.mxu0 0.0
  %91 = vmatpush1.msra.mxu0 0.0
  %92 = vmatprep.subr.mxu0 0.0
  %93 = vmatpush1.msra.mxu0 0.0
  %94 = vmatprep.subr.mxu0 0.0
  %95 = vmatpush1.msra.mxu0 0.0
  %96 = vmatprep.subr.mxu0 0.0
  %97 = vmatpush1.msra.mxu0 0.0
  %98 = vmatprep.subr.mxu0 0.0
  %99 = vmatpush1.msra.mxu0 0.0
  %100 = vmatprep.subr.mxu0 0.0
  %101 = vmatpush1.msra.mxu0 0.0
  %102 = vmatprep.subr.mxu0 0.0
  %103 = vmatpush1.msra.mxu0 0.0
  %104 = vmatprep.subr.mxu0 0.0
  %105 = vmatpush1.msra.mxu0 0.0
  %106 = vmatprep.subr.mxu0 0.0
  %107 = vmatpush1.msra.mxu0 0.0
  %108 = vmatprep.subr.mxu0 0.0
  %109 = vmatpush1.msra.mxu0 0.0
  %110 = vmatprep.mubr.f32.mxu0 0.0
  %111 = vmatmul.mubr.f32.gmra.mrb[0].mxu0 %v41
  %v112 = vpop.f32.mrb[0].mxu0
  %v113 = vadd.f32 %v38, %v112
  %v114 = vpop.f32.mrb[0].mxu0
  %115 = vmatprep.mubr.f32.mxu0 0.0
  %116 = vmatmul.mubr.f32.gmra.mrb[0].mxu0 %v44
  %v117 = vpop.f32.mrb[0].mxu0
  %v118 = vadd.f32 %v38, %v117
  %v119 = vpop.f32.mrb[0].mxu0
  %120 = vdwg.mxu0
  %v121 = vld [vmem:[%s3] sm:$0xff]
  %v122 = vld [vmem:[%s3 + $0x8] sm:$0xff]
  %v123 = vld [vmem:[%s5] sm:$0x1]
  %v125 = vlaneseq
  %v126 = vshrl.u32 %v125, 7
  %v127 = vsub.s32 0, %v126
  %v128 = vrot.slane %v123, %v127
  %vm130 = vcmask 130048
  %v132 = vsel %vm130, %v28, 0
  %v135 = vsel %vm130, %v29, 0
  %137 = vmatprep.subr.mxu0 0.0
  %138 = vmatpush1.msra.mxu0 %v121
  %139 = vmatprep.subr.mxu0 0.0
  %140 = vmatpush1.msra.mxu0 %v122
  %141 = vmatprep.subr.mxu0 0.0
  %142 = vmatpush1.msra.mxu0 0.0
  %143 = vmatprep.subr.mxu0 0.0
  %144 = vmatpush1.msra.mxu0 0.0
  %145 = vmatprep.subr.mxu0 0.0
  %146 = vmatpush1.msra.mxu0 0.0
  %147 = vmatprep.subr.mxu0 0.0
  %148 = vmatpush1.msra.mxu0 0.0
  %149 = vmatprep.subr.mxu0 0.0
  %150 = vmatpush1.msra.mxu0 0.0
  %151 = vmatprep.subr.mxu0 0.0
  %152 = vmatpush1.msra.mxu0 0.0
  %153 = vmatprep.subr.mxu0 0.0
  %154 = vmatpush1.msra.mxu0 0.0
  %155 = vmatprep.subr.mxu0 0.0
  %156 = vmatpush1.msra.mxu0 0.0
  %157 = vmatprep.subr.mxu0 0.0
  %158 = vmatpush1.msra.mxu0 0.0
  %159 = vmatprep.subr.mxu0 0.0
  %160 = vmatpush1.msra.mxu0 0.0
  %161 = vmatprep.subr.mxu0 0.0
  %162 = vmatpush1.msra.mxu0 0.0
  %163 = vmatprep.subr.mxu0 0.0
  %164 = vmatpush1.msra.mxu0 0.0
  %165 = vmatprep.subr.mxu0 0.0
  %166 = vmatpush1.msra.mxu0 0.0
  %167 = vmatprep.subr.mxu0 0.0
  %168 = vmatpush1.msra.mxu0 0.0
  %169 = vmatprep.subr.mxu0 0.0
  %170 = vmatpush1.msra.mxu0 0.0
  %171 = vmatprep.subr.mxu0 0.0
  %172 = vmatpush1.msra.mxu0 0.0
  %173 = vmatprep.subr.mxu0 0.0
  %174 = vmatpush1.msra.mxu0 0.0
  %175 = vmatprep.subr.mxu0 0.0
  %176 = vmatpush1.msra.mxu0 0.0
  %177 = vmatprep.subr.mxu0 0.0
  %178 = vmatpush1.msra.mxu0 0.0
  %179 = vmatprep.subr.mxu0 0.0
  %180 = vmatpush1.msra.mxu0 0.0
  %181 = vmatprep.subr.mxu0 0.0
  %182 = vmatpush1.msra.mxu0 0.0
  %183 = vmatprep.subr.mxu0 0.0
  %184 = vmatpush1.msra.mxu0 0.0
  %185 = vmatprep.subr.mxu0 0.0
  %186 = vmatpush1.msra.mxu0 0.0
  %187 = vmatprep.subr.mxu0 0.0
  %188 = vmatpush1.msra.mxu0 0.0
  %189 = vmatprep.subr.mxu0 0.0
  %190 = vmatpush1.msra.mxu0 0.0
  %191 = vmatprep.subr.mxu0 0.0
  %192 = vmatpush1.msra.mxu0 0.0
  %193 = vmatprep.subr.mxu0 0.0
  %194 = vmatpush1.msra.mxu0 0.0
  %195 = vmatprep.subr.mxu0 0.0
  %196 = vmatpush1.msra.mxu0 0.0
  %197 = vmatprep.subr.mxu0 0.0
  %198 = vmatpush1.msra.mxu0 0.0
  %199 = vmatprep.subr.mxu0 0.0
  %200 = vmatpush1.msra.mxu0 0.0
  %201 = vmatprep.mubr.f32.mxu0 0.0
  %202 = vmatmul.mubr.f32.gmra.mrb[0].mxu0 %v132
  %v203 = vpop.f32.mrb[0].mxu0
  %v204 = vadd.f32 %v128, %v203
  %v205 = vpop.f32.mrb[0].mxu0
  %206 = vmatprep.mubr.f32.mxu0 0.0
  %207 = vmatmul.mubr.f32.gmra.mrb[0].mxu0 %v135
  %v208 = vpop.f32.mrb[0].mxu0
  %v209 = vadd.f32 %v128, %v208
  %v210 = vpop.f32.mrb[0].mxu0
  %211 = vdwg.mxu0
  %v212 = vld [vmem:[%s4] sm:$0xff]
  %v213 = vld [vmem:[%s4 + $0x8] sm:$0xff]
  %v214 = vld [vmem:[%s4 + $0x10] sm:$0xff]
  %v215 = vld [vmem:[%s4 + $0x18] sm:$0xff]
  %vm216 = vcmask 64512
  %v218 = vsel %vm216, %v113, 0
  %v221 = vsel %vm216, %v204, 0
  %223 = vmatprep.subr.mxu0 0.0
  %224 = vmatpush1.xpose.msra.mxu0 %v221
  %225 = vmatprep.subr.mxu0 0.0
  %226 = vmatpush1.xpose.msra.mxu0 0.0
  %227 = vmatprep.subr.mxu0 0.0
  %228 = vmatpush1.xpose.msra.mxu0 0.0
  %229 = vmatprep.subr.mxu0 0.0
  %230 = vmatpush1.xpose.msra.mxu0 0.0
  %231 = vmatprep.subr.mxu0 0.0
  %232 = vmatpush1.xpose.msra.mxu0 0.0
  %233 = vmatprep.subr.mxu0 0.0
  %234 = vmatpush1.xpose.msra.mxu0 0.0
  %235 = vmatprep.subr.mxu0 0.0
  %236 = vmatpush1.xpose.msra.mxu0 0.0
  %237 = vmatprep.subr.mxu0 0.0
  %238 = vmatpush1.xpose.msra.mxu0 0.0
  %239 = vmatprep.subr.mxu0 0.0
  %240 = vmatpush1.xpose.msra.mxu0 0.0
  %241 = vmatprep.subr.mxu0 0.0
  %242 = vmatpush1.xpose.msra.mxu0 0.0
  %243 = vmatprep.subr.mxu0 0.0
  %244 = vmatpush1.xpose.msra.mxu0 0.0
  %245 = vmatprep.subr.mxu0 0.0
  %246 = vmatpush1.xpose.msra.mxu0 0.0
  %247 = vmatprep.subr.mxu0 0.0
  %248 = vmatpush1.xpose.msra.mxu0 0.0
  %249 = vmatprep.subr.mxu0 0.0
  %250 = vmatpush1.xpose.msra.mxu0 0.0
  %251 = vmatprep.subr.mxu0 0.0
  %252 = vmatpush1.xpose.msra.mxu0 0.0
  %253 = vmatprep.subr.mxu0 0.0
  %254 = vmatpush1.xpose.msra.mxu0 0.0
  %255 = vmatprep.subr.mxu0 0.0
  %256 = vmatpush1.xpose.msra.mxu0 0.0
  %257 = vmatprep.subr.mxu0 0.0
  %258 = vmatpush1.xpose.msra.mxu0 0.0
  %259 = vmatprep.subr.mxu0 0.0
  %260 = vmatpush1.xpose.msra.mxu0 0.0
  %261 = vmatprep.subr.mxu0 0.0
  %262 = vmatpush1.xpose.msra.mxu0 0.0
  %263 = vmatprep.subr.mxu0 0.0
  %264 = vmatpush1.xpose.msra.mxu0 0.0
  %265 = vmatprep.subr.mxu0 0.0
  %266 = vmatpush1.xpose.msra.mxu0 0.0
  %267 = vmatprep.subr.mxu0 0.0
  %268 = vmatpush1.xpose.msra.mxu0 0.0
  %269 = vmatprep.subr.mxu0 0.0
  %270 = vmatpush1.xpose.msra.mxu0 0.0
  %271 = vmatprep.subr.mxu0 0.0
  %272 = vmatpush1.xpose.msra.mxu0 0.0
  %273 = vmatprep.subr.mxu0 0.0
  %274 = vmatpush1.xpose.msra.mxu0 0.0
  %275 = vmatprep.subr.mxu0 0.0
  %276 = vmatpush1.xpose.msra.mxu0 0.0
  %277 = vmatprep.subr.mxu0 0.0
  %278 = vmatpush1.xpose.msra.mxu0 0.0
  %279 = vmatprep.subr.mxu0 0.0
  %280 = vmatpush1.xpose.msra.mxu0 0.0
  %281 = vmatprep.subr.mxu0 0.0
  %282 = vmatpush1.xpose.msra.mxu0 0.0
  %283 = vmatprep.subr.mxu0 0.0
  %284 = vmatpush1.xpose.msra.mxu0 0.0
  %285 = vmatprep.subr.mxu0 0.0
  %286 = vmatpush1.xpose.msra.mxu0 0.0
  %287 = vmatprep.mubr.f32.mxu0 0.0
  %288 = vmatmul.mubr.f32.gmra.mrb[0].mxu0 %v218
  %v289 = vpop.f32.mrb[0].mxu0
  %v290 = vadd.f32 0.0, %v289
  %v291 = vpop.f32.mrb[0].mxu0
  %292 = vdwg.mxu0
  %v294 = vsel %vm216, %v118, 0
  %v297 = vsel %vm216, %v209, 0
  %299 = vmatprep.subr.mxu0 0.0
  %300 = vmatpush1.xpose.msra.mxu0 %v297
  %301 = vmatprep.subr.mxu0 0.0
  %302 = vmatpush1.xpose.msra.mxu0 0.0
  %303 = vmatprep.subr.mxu0 0.0
  %304 = vmatpush1.xpose.msra.mxu0 0.0
  %305 = vmatprep.subr.mxu0 0.0
  %306 = vmatpush1.xpose.msra.mxu0 0.0
  %307 = vmatprep.subr.mxu0 0.0
  %308 = vmatpush1.xpose.msra.mxu0 0.0
  %309 = vmatprep.subr.mxu0 0.0
  %310 = vmatpush1.xpose.msra.mxu0 0.0
  %311 = vmatprep.subr.mxu0 0.0
  %312 = vmatpush1.xpose.msra.mxu0 0.0
  %313 = vmatprep.subr.mxu0 0.0
  %314 = vmatpush1.xpose.msra.mxu0 0.0
  %315 = vmatprep.subr.mxu0 0.0
  %316 = vmatpush1.xpose.msra.mxu0 0.0
  %317 = vmatprep.subr.mxu0 0.0
  %318 = vmatpush1.xpose.msra.mxu0 0.0
  %319 = vmatprep.subr.mxu0 0.0
  %320 = vmatpush1.xpose.msra.mxu0 0.0
  %321 = vmatprep.subr.mxu0 0.0
  %322 = vmatpush1.xpose.msra.mxu0 0.0
  %323 = vmatprep.subr.mxu0 0.0
  %324 = vmatpush1.xpose.msra.mxu0 0.0
  %325 = vmatprep.subr.mxu0 0.0
  %326 = vmatpush1.xpose.msra.mxu0 0.0
  %327 = vmatprep.subr.mxu0 0.0
  %328 = vmatpush1.xpose.msra.mxu0 0.0
  %329 = vmatprep.subr.mxu0 0.0
  %330 = vmatpush1.xpose.msra.mxu0 0.0
  %331 = vmatprep.subr.mxu0 0.0
  %332 = vmatpush1.xpose.msra.mxu0 0.0
  %333 = vmatprep.subr.mxu0 0.0
  %334 = vmatpush1.xpose.msra.mxu0 0.0
  %335 = vmatprep.subr.mxu0 0.0
  %336 = vmatpush1.xpose.msra.mxu0 0.0
  %337 = vmatprep.subr.mxu0 0.0
  %338 = vmatpush1.xpose.msra.mxu0 0.0
  %339 = vmatprep.subr.mxu0 0.0
  %340 = vmatpush1.xpose.msra.mxu0 0.0
  %341 = vmatprep.subr.mxu0 0.0
  %342 = vmatpush1.xpose.msra.mxu0 0.0
  %343 = vmatprep.subr.mxu0 0.0
  %344 = vmatpush1.xpose.msra.mxu0 0.0
  %345 = vmatprep.subr.mxu0 0.0
  %346 = vmatpush1.xpose.msra.mxu0 0.0
  %347 = vmatprep.subr.mxu0 0.0
  %348 = vmatpush1.xpose.msra.mxu0 0.0
  %349 = vmatprep.subr.mxu0 0.0
  %350 = vmatpush1.xpose.msra.mxu0 0.0
  %351 = vmatprep.subr.mxu0 0.0
  %352 = vmatpush1.xpose.msra.mxu0 0.0
  %353 = vmatprep.subr.mxu0 0.0
  %354 = vmatpush1.xpose.msra.mxu0 0.0
  %355 = vmatprep.subr.mxu0 0.0
  %356 = vmatpush1.xpose.msra.mxu0 0.0
  %357 = vmatprep.subr.mxu0 0.0
  %358 = vmatpush1.xpose.msra.mxu0 0.0
  %359 = vmatprep.subr.mxu0 0.0
  %360 = vmatpush1.xpose.msra.mxu0 0.0
  %361 = vmatprep.subr.mxu0 0.0
  %362 = vmatpush1.xpose.msra.mxu0 0.0
  %363 = vmatprep.mubr.f32.mxu0 0.0
  %364 = vmatmul.mubr.f32.gmra.mrb[0].mxu0 %v294
  %v365 = vpop.f32.mrb[0].mxu0
  %v366 = vadd.f32 0.0, %v365
  %v367 = vpop.f32.mrb[0].mxu0
  %368 = vdwg.mxu0
  %v369 = vsel %vm216, %v290, -inf
  %370 = vmax.xlane.f32.xlu0 %v369
  %v371 = vpop.xlane.xlu0 %370
  %v372 = vsel %vm216, %v366, -inf
  %373 = vmax.xlane.f32.xlu0 %v372
  %v374 = vpop.xlane.xlu0 %373
  %v375 = vsub.f32 %v290, %v371
  %v376 = vsub.f32 %v366, %v374
  %v377 = vmul.f32 %v375, 1.442695
  %v378 = vpow.pop %v377
  %v379 = vmul.f32 %v376, 1.442695
  %v380 = vpow.pop %v379
  %v381 = vsel %vm216, %v378, 0.0
  %382 = vadd.xlane.f32.xlu0 %v381
  %v383 = vpop.xlane.xlu0 %382
  %v384 = vsel %vm216, %v380, 0.0
  %385 = vadd.xlane.f32.xlu0 %v384
  %v386 = vpop.xlane.xlu0 %385
  %v387 = vrcp.pop %v383
  %v388 = vrcp.pop %v386
  %v389 = vmul.f32 %v378, %v387
  %v390 = vmul.f32 %v380, %v388
  %391 = vrot.lane.b32.xlu0 %v204, 96
  %v392 = vpop.permute.xlu0 %391
  %v395 = vsel %vm216, %v389, 0
  %397 = vmatprep.subr.mxu0 0.0
  %398 = vmatpush1.msra.mxu0 %v392
  %399 = vmatprep.subr.mxu0 0.0
  %400 = vmatpush1.msra.mxu0 0.0
  %401 = vmatprep.subr.mxu0 0.0
  %402 = vmatpush1.msra.mxu0 0.0
  %403 = vmatprep.subr.mxu0 0.0
  %404 = vmatpush1.msra.mxu0 0.0
  %405 = vmatprep.subr.mxu0 0.0
  %406 = vmatpush1.msra.mxu0 0.0
  %407 = vmatprep.subr.mxu0 0.0
  %408 = vmatpush1.msra.mxu0 0.0
  %409 = vmatprep.subr.mxu0 0.0
  %410 = vmatpush1.msra.mxu0 0.0
  %411 = vmatprep.subr.mxu0 0.0
  %412 = vmatpush1.msra.mxu0 0.0
  %413 = vmatprep.subr.mxu0 0.0
  %414 = vmatpush1.msra.mxu0 0.0
  %415 = vmatprep.subr.mxu0 0.0
  %416 = vmatpush1.msra.mxu0 0.0
  %417 = vmatprep.subr.mxu0 0.0
  %418 = vmatpush1.msra.mxu0 0.0
  %419 = vmatprep.subr.mxu0 0.0
  %420 = vmatpush1.msra.mxu0 0.0
  %421 = vmatprep.subr.mxu0 0.0
  %422 = vmatpush1.msra.mxu0 0.0
  %423 = vmatprep.subr.mxu0 0.0
  %424 = vmatpush1.msra.mxu0 0.0
  %425 = vmatprep.subr.mxu0 0.0
  %426 = vmatpush1.msra.mxu0 0.0
  %427 = vmatprep.subr.mxu0 0.0
  %428 = vmatpush1.msra.mxu0 0.0
  %429 = vmatprep.subr.mxu0 0.0
  %430 = vmatpush1.msra.mxu0 0.0
  %431 = vmatprep.subr.mxu0 0.0
  %432 = vmatpush1.msra.mxu0 0.0
  %433 = vmatprep.subr.mxu0 0.0
  %434 = vmatpush1.msra.mxu0 0.0
  %435 = vmatprep.subr.mxu0 0.0
  %436 = vmatpush1.msra.mxu0 0.0
  %437 = vmatprep.subr.mxu0 0.0
  %438 = vmatpush1.msra.mxu0 0.0
  %439 = vmatprep.subr.mxu0 0.0
  %440 = vmatpush1.msra.mxu0 0.0
  %441 = vmatprep.subr.mxu0 0.0
  %442 = vmatpush1.msra.mxu0 0.0
  %443 = vmatprep.subr.mxu0 0.0
  %444 = vmatpush1.msra.mxu0 0.0
  %445 = vmatprep.subr.mxu0 0.0
  %446 = vmatpush1.msra.mxu0 0.0
  %447 = vmatprep.subr.mxu0 0.0
  %448 = vmatpush1.msra.mxu0 0.0
  %449 = vmatprep.subr.mxu0 0.0
  %450 = vmatpush1.msra.mxu0 0.0
  %451 = vmatprep.subr.mxu0 0.0
  %452 = vmatpush1.msra.mxu0 0.0
  %453 = vmatprep.subr.mxu0 0.0
  %454 = vmatpush1.msra.mxu0 0.0
  %455 = vmatprep.subr.mxu0 0.0
  %456 = vmatpush1.msra.mxu0 0.0
  %457 = vmatprep.subr.mxu0 0.0
  %458 = vmatpush1.msra.mxu0 0.0
  %459 = vmatprep.subr.mxu0 0.0
  %460 = vmatpush1.msra.mxu0 0.0
  %461 = vmatprep.mubr.f32.mxu0 0.0
  %462 = vmatmul.mubr.f32.gmra.mrb[0].mxu0 %v395
  %v463 = vpop.f32.mrb[0].mxu0
  %v464 = vadd.f32 0.0, %v463
  %v465 = vpop.f32.mrb[0].mxu0
  %466 = vdwg.mxu0
  %467 = vrot.lane.b32.xlu0 %v209, 96
  %v468 = vpop.permute.xlu0 %467
  %v471 = vsel %vm216, %v390, 0
  %473 = vmatprep.subr.mxu0 0.0
  %474 = vmatpush1.msra.mxu0 %v468
  %475 = vmatprep.subr.mxu0 0.0
  %476 = vmatpush1.msra.mxu0 0.0
  %477 = vmatprep.subr.mxu0 0.0
  %478 = vmatpush1.msra.mxu0 0.0
  %479 = vmatprep.subr.mxu0 0.0
  %480 = vmatpush1.msra.mxu0 0.0
  %481 = vmatprep.subr.mxu0 0.0
  %482 = vmatpush1.msra.mxu0 0.0
  %483 = vmatprep.subr.mxu0 0.0
  %484 = vmatpush1.msra.mxu0 0.0
  %485 = vmatprep.subr.mxu0 0.0
  %486 = vmatpush1.msra.mxu0 0.0
  %487 = vmatprep.subr.mxu0 0.0
  %488 = vmatpush1.msra.mxu0 0.0
  %489 = vmatprep.subr.mxu0 0.0
  %490 = vmatpush1.msra.mxu0 0.0
  %491 = vmatprep.subr.mxu0 0.0
  %492 = vmatpush1.msra.mxu0 0.0
  %493 = vmatprep.subr.mxu0 0.0
  %494 = vmatpush1.msra.mxu0 0.0
  %495 = vmatprep.subr.mxu0 0.0
  %496 = vmatpush1.msra.mxu0 0.0
  %497 = vmatprep.subr.mxu0 0.0
  %498 = vmatpush1.msra.mxu0 0.0
  %499 = vmatprep.subr.mxu0 0.0
  %500 = vmatpush1.msra.mxu0 0.0
  %501 = vmatprep.subr.mxu0 0.0
  %502 = vmatpush1.msra.mxu0 0.0
  %503 = vmatprep.subr.mxu0 0.0
  %504 = vmatpush1.msra.mxu0 0.0
  %505 = vmatprep.subr.mxu0 0.0
  %506 = vmatpush1.msra.mxu0 0.0
  %507 = vmatprep.subr.mxu0 0.0
  %508 = vmatpush1.msra.mxu0 0.0
  %509 = vmatprep.subr.mxu0 0.0
  %510 = vmatpush1.msra.mxu0 0.0
  %511 = vmatprep.subr.mxu0 0.0
  %512 = vmatpush1.msra.mxu0 0.0
  %513 = vmatprep.subr.mxu0 0.0
  %514 = vmatpush1.msra.mxu0 0.0
  %515 = vmatprep.subr.mxu0 0.0
  %516 = vmatpush1.msra.mxu0 0.0
  %517 = vmatprep.subr.mxu0 0.0
  %518 = vmatpush1.msra.mxu0 0.0
  %519 = vmatprep.subr.mxu0 0.0
  %520 = vmatpush1.msra.mxu0 0.0
  %521 = vmatprep.subr.mxu0 0.0
  %522 = vmatpush1.msra.mxu0 0.0
  %523 = vmatprep.subr.mxu0 0.0
  %524 = vmatpush1.msra.mxu0 0.0
  %525 = vmatprep.subr.mxu0 0.0
  %526 = vmatpush1.msra.mxu0 0.0
  %527 = vmatprep.subr.mxu0 0.0
  %528 = vmatpush1.msra.mxu0 0.0
  %529 = vmatprep.subr.mxu0 0.0
  %530 = vmatpush1.msra.mxu0 0.0
  %531 = vmatprep.subr.mxu0 0.0
  %532 = vmatpush1.msra.mxu0 0.0
  %533 = vmatprep.subr.mxu0 0.0
  %534 = vmatpush1.msra.mxu0 0.0
  %535 = vmatprep.subr.mxu0 0.0
  %536 = vmatpush1.msra.mxu0 0.0
  %537 = vmatprep.mubr.f32.mxu0 0.0
  %538 = vmatmul.mubr.f32.gmra.mrb[0].mxu0 %v471
  %v539 = vpop.f32.mrb[0].mxu0
  %v540 = vadd.f32 0.0, %v539
  %v541 = vpop.f32.mrb[0].mxu0
  %542 = vdwg.mxu0
  %543 = vrot.lane.b32.xlu0 %v113, 120
  %v544 = vpop.permute.xlu0 %543
  %545 = vrot.lane.b32.xlu0 %v204, 120
  %v546 = vpop.permute.xlu0 %545
  %v547 = vsel %vm216, %v544, 0
  %v549 = vsel %vm216, %v546, 0
  %551 = vmatprep.subr.mxu0 0.0
  %552 = vmatpush1.xpose.msra.mxu0 %v549
  %553 = vmatprep.subr.mxu0 0.0
  %554 = vmatpush1.xpose.msra.mxu0 0.0
  %555 = vmatprep.subr.mxu0 0.0
  %556 = vmatpush1.xpose.msra.mxu0 0.0
  %557 = vmatprep.subr.mxu0 0.0
  %558 = vmatpush1.xpose.msra.mxu0 0.0
  %559 = vmatprep.subr.mxu0 0.0
  %560 = vmatpush1.xpose.msra.mxu0 0.0
  %561 = vmatprep.subr.mxu0 0.0
  %562 = vmatpush1.xpose.msra.mxu0 0.0
  %563 = vmatprep.subr.mxu0 0.0
  %564 = vmatpush1.xpose.msra.mxu0 0.0
  %565 = vmatprep.subr.mxu0 0.0
  %566 = vmatpush1.xpose.msra.mxu0 0.0
  %567 = vmatprep.subr.mxu0 0.0
  %568 = vmatpush1.xpose.msra.mxu0 0.0
  %569 = vmatprep.subr.mxu0 0.0
  %570 = vmatpush1.xpose.msra.mxu0 0.0
  %571 = vmatprep.subr.mxu0 0.0
  %572 = vmatpush1.xpose.msra.mxu0 0.0
  %573 = vmatprep.subr.mxu0 0.0
  %574 = vmatpush1.xpose.msra.mxu0 0.0
  %575 = vmatprep.subr.mxu0 0.0
  %576 = vmatpush1.xpose.msra.mxu0 0.0
  %577 = vmatprep.subr.mxu0 0.0
  %578 = vmatpush1.xpose.msra.mxu0 0.0
  %579 = vmatprep.subr.mxu0 0.0
  %580 = vmatpush1.xpose.msra.mxu0 0.0
  %581 = vmatprep.subr.mxu0 0.0
  %582 = vmatpush1.xpose.msra.mxu0 0.0
  %583 = vmatprep.subr.mxu0 0.0
  %584 = vmatpush1.xpose.msra.mxu0 0.0
  %585 = vmatprep.subr.mxu0 0.0
  %586 = vmatpush1.xpose.msra.mxu0 0.0
  %587 = vmatprep.subr.mxu0 0.0
  %588 = vmatpush1.xpose.msra.mxu0 0.0
  %589 = vmatprep.subr.mxu0 0.0
  %590 = vmatpush1.xpose.msra.mxu0 0.0
  %591 = vmatprep.subr.mxu0 0.0
  %592 = vmatpush1.xpose.msra.mxu0 0.0
  %593 = vmatprep.subr.mxu0 0.0
  %594 = vmatpush1.xpose.msra.mxu0 0.0
  %595 = vmatprep.subr.mxu0 0.0
  %596 = vmatpush1.xpose.msra.mxu0 0.0
  %597 = vmatprep.subr.mxu0 0.0
  %598 = vmatpush1.xpose.msra.mxu0 0.0
  %599 = vmatprep.subr.mxu0 0.0
  %600 = vmatpush1.xpose.msra.mxu0 0.0
  %601 = vmatprep.subr.mxu0 0.0
  %602 = vmatpush1.xpose.msra.mxu0 0.0
  %603 = vmatprep.subr.mxu0 0.0
  %604 = vmatpush1.xpose.msra.mxu0 0.0
  %605 = vmatprep.subr.mxu0 0.0
  %606 = vmatpush1.xpose.msra.mxu0 0.0
  %607 = vmatprep.subr.mxu0 0.0
  %608 = vmatpush1.xpose.msra.mxu0 0.0
  %609 = vmatprep.subr.mxu0 0.0
  %610 = vmatpush1.xpose.msra.mxu0 0.0
  %611 = vmatprep.subr.mxu0 0.0
  %612 = vmatpush1.xpose.msra.mxu0 0.0
  %613 = vmatprep.subr.mxu0 0.0
  %614 = vmatpush1.xpose.msra.mxu0 0.0
  %615 = vmatprep.mubr.f32.mxu0 0.0
  %616 = vmatmul.mubr.f32.gmra.mrb[0].mxu0 %v547
  %v617 = vpop.f32.mrb[0].mxu0
  %v618 = vadd.f32 0.0, %v617
  %v619 = vpop.f32.mrb[0].mxu0
  %620 = vdwg.mxu0
  %621 = vrot.lane.b32.xlu0 %v118, 120
  %v622 = vpop.permute.xlu0 %621
  %623 = vrot.lane.b32.xlu0 %v209, 120
  %v624 = vpop.permute.xlu0 %623
  %v625 = vsel %vm216, %v622, 0
  %v627 = vsel %vm216, %v624, 0
  %629 = vmatprep.subr.mxu0 0.0
  %630 = vmatpush1.xpose.msra.mxu0 %v627
  %631 = vmatprep.subr.mxu0 0.0
  %632 = vmatpush1.xpose.msra.mxu0 0.0
  %633 = vmatprep.subr.mxu0 0.0
  %634 = vmatpush1.xpose.msra.mxu0 0.0
  %635 = vmatprep.subr.mxu0 0.0
  %636 = vmatpush1.xpose.msra.mxu0 0.0
  %637 = vmatprep.subr.mxu0 0.0
  %638 = vmatpush1.xpose.msra.mxu0 0.0
  %639 = vmatprep.subr.mxu0 0.0
  %640 = vmatpush1.xpose.msra.mxu0 0.0
  %641 = vmatprep.subr.mxu0 0.0
  %642 = vmatpush1.xpose.msra.mxu0 0.0
  %643 = vmatprep.subr.mxu0 0.0
  %644 = vmatpush1.xpose.msra.mxu0 0.0
  %645 = vmatprep.subr.mxu0 0.0
  %646 = vmatpush1.xpose.msra.mxu0 0.0
  %647 = vmatprep.subr.mxu0 0.0
  %648 = vmatpush1.xpose.msra.mxu0 0.0
  %649 = vmatprep.subr.mxu0 0.0
  %650 = vmatpush1.xpose.msra.mxu0 0.0
  %651 = vmatprep.subr.mxu0 0.0
  %652 = vmatpush1.xpose.msra.mxu0 0.0
  %653 = vmatprep.subr.mxu0 0.0
  %654 = vmatpush1.xpose.msra.mxu0 0.0
  %655 = vmatprep.subr.mxu0 0.0
  %656 = vmatpush1.xpose.msra.mxu0 0.0
  %657 = vmatprep.subr.mxu0 0.0
  %658 = vmatpush1.xpose.msra.mxu0 0.0
  %659 = vmatprep.subr.mxu0 0.0
  %660 = vmatpush1.xpose.msra.mxu0 0.0
  %661 = vmatprep.subr.mxu0 0.0
  %662 = vmatpush1.xpose.msra.mxu0 0.0
  %663 = vmatprep.subr.mxu0 0.0
  %664 = vmatpush1.xpose.msra.mxu0 0.0
  %665 = vmatprep.subr.mxu0 0.0
  %666 = vmatpush1.xpose.msra.mxu0 0.0
  %667 = vmatprep.subr.mxu0 0.0
  %668 = vmatpush1.xpose.msra.mxu0 0.0
  %669 = vmatprep.subr.mxu0 0.0
  %670 = vmatpush1.xpose.msra.mxu0 0.0
  %671 = vmatprep.subr.mxu0 0.0
  %672 = vmatpush1.xpose.msra.mxu0 0.0
  %673 = vmatprep.subr.mxu0 0.0
  %674 = vmatpush1.xpose.msra.mxu0 0.0
  %675 = vmatprep.subr.mxu0 0.0
  %676 = vmatpush1.xpose.msra.mxu0 0.0
  %677 = vmatprep.subr.mxu0 0.0
  %678 = vmatpush1.xpose.msra.mxu0 0.0
  %679 = vmatprep.subr.mxu0 0.0
  %680 = vmatpush1.xpose.msra.mxu0 0.0
  %681 = vmatprep.subr.mxu0 0.0
  %682 = vmatpush1.xpose.msra.mxu0 0.0
  %683 = vmatprep.subr.mxu0 0.0
  %684 = vmatpush1.xpose.msra.mxu0 0.0
  %685 = vmatprep.subr.mxu0 0.0
  %686 = vmatpush1.xpose.msra.mxu0 0.0
  %687 = vmatprep.subr.mxu0 0.0
  %688 = vmatpush1.xpose.msra.mxu0 0.0
  %689 = vmatprep.subr.mxu0 0.0
  %690 = vmatpush1.xpose.msra.mxu0 0.0
  %691 = vmatprep.subr.mxu0 0.0
  %692 = vmatpush1.xpose.msra.mxu0 0.0
  %693 = vmatprep.mubr.f32.mxu0 0.0
  %694 = vmatmul.mubr.f32.gmra.mrb[0].mxu0 %v625
  %v695 = vpop.f32.mrb[0].mxu0
  %v696 = vadd.f32 0.0, %v695
  %v697 = vpop.f32.mrb[0].mxu0
  %698 = vdwg.mxu0
  %v699 = vsel %vm216, %v618, -inf
  %700 = vmax.xlane.f32.xlu0 %v699
  %v701 = vpop.xlane.xlu0 %700
  %v702 = vsel %vm216, %v696, -inf
  %703 = vmax.xlane.f32.xlu0 %v702
  %v704 = vpop.xlane.xlu0 %703
  %v705 = vsub.f32 %v618, %v701
  %v706 = vsub.f32 %v696, %v704
  %v707 = vmul.f32 %v705, 1.442695
  %v708 = vpow.pop %v707
  %v709 = vmul.f32 %v706, 1.442695
  %v710 = vpow.pop %v709
  %v711 = vsel %vm216, %v708, 0.0
  %712 = vadd.xlane.f32.xlu0 %v711
  %v713 = vpop.xlane.xlu0 %712
  %v714 = vsel %vm216, %v710, 0.0
  %715 = vadd.xlane.f32.xlu0 %v714
  %v716 = vpop.xlane.xlu0 %715
  %v717 = vrcp.pop %v713
  %v718 = vrcp.pop %v716
  %v719 = vmul.f32 %v708, %v717
  %v720 = vmul.f32 %v710, %v718
  %721 = vrot.lane.b32.xlu0 %v204, 88
  %v722 = vpop.permute.xlu0 %721
  %v725 = vsel %vm216, %v719, 0
  %727 = vmatprep.subr.mxu0 0.0
  %728 = vmatpush1.msra.mxu0 %v722
  %729 = vmatprep.subr.mxu0 0.0
  %730 = vmatpush1.msra.mxu0 0.0
  %731 = vmatprep.subr.mxu0 0.0
  %732 = vmatpush1.msra.mxu0 0.0
  %733 = vmatprep.subr.mxu0 0.0
  %734 = vmatpush1.msra.mxu0 0.0
  %735 = vmatprep.subr.mxu0 0.0
  %736 = vmatpush1.msra.mxu0 0.0
  %737 = vmatprep.subr.mxu0 0.0
  %738 = vmatpush1.msra.mxu0 0.0
  %739 = vmatprep.subr.mxu0 0.0
  %740 = vmatpush1.msra.mxu0 0.0
  %741 = vmatprep.subr.mxu0 0.0
  %742 = vmatpush1.msra.mxu0 0.0
  %743 = vmatprep.subr.mxu0 0.0
  %744 = vmatpush1.msra.mxu0 0.0
  %745 = vmatprep.subr.mxu0 0.0
  %746 = vmatpush1.msra.mxu0 0.0
  %747 = vmatprep.subr.mxu0 0.0
  %748 = vmatpush1.msra.mxu0 0.0
  %749 = vmatprep.subr.mxu0 0.0
  %750 = vmatpush1.msra.mxu0 0.0
  %751 = vmatprep.subr.mxu0 0.0
  %752 = vmatpush1.msra.mxu0 0.0
  %753 = vmatprep.subr.mxu0 0.0
  %754 = vmatpush1.msra.mxu0 0.0
  %755 = vmatprep.subr.mxu0 0.0
  %756 = vmatpush1.msra.mxu0 0.0
  %757 = vmatprep.subr.mxu0 0.0
  %758 = vmatpush1.msra.mxu0 0.0
  %759 = vmatprep.subr.mxu0 0.0
  %760 = vmatpush1.msra.mxu0 0.0
  %761 = vmatprep.subr.mxu0 0.0
  %762 = vmatpush1.msra.mxu0 0.0
  %763 = vmatprep.subr.mxu0 0.0
  %764 = vmatpush1.msra.mxu0 0.0
  %765 = vmatprep.subr.mxu0 0.0
  %766 = vmatpush1.msra.mxu0 0.0
  %767 = vmatprep.subr.mxu0 0.0
  %768 = vmatpush1.msra.mxu0 0.0
  %769 = vmatprep.subr.mxu0 0.0
  %770 = vmatpush1.msra.mxu0 0.0
  %771 = vmatprep.subr.mxu0 0.0
  %772 = vmatpush1.msra.mxu0 0.0
  %773 = vmatprep.subr.mxu0 0.0
  %774 = vmatpush1.msra.mxu0 0.0
  %775 = vmatprep.subr.mxu0 0.0
  %776 = vmatpush1.msra.mxu0 0.0
  %777 = vmatprep.subr.mxu0 0.0
  %778 = vmatpush1.msra.mxu0 0.0
  %779 = vmatprep.subr.mxu0 0.0
  %780 = vmatpush1.msra.mxu0 0.0
  %781 = vmatprep.subr.mxu0 0.0
  %782 = vmatpush1.msra.mxu0 0.0
  %783 = vmatprep.subr.mxu0 0.0
  %784 = vmatpush1.msra.mxu0 0.0
  %785 = vmatprep.subr.mxu0 0.0
  %786 = vmatpush1.msra.mxu0 0.0
  %787 = vmatprep.subr.mxu0 0.0
  %788 = vmatpush1.msra.mxu0 0.0
  %789 = vmatprep.subr.mxu0 0.0
  %790 = vmatpush1.msra.mxu0 0.0
  %791 = vmatprep.mubr.f32.mxu0 0.0
  %792 = vmatmul.mubr.f32.gmra.mrb[0].mxu0 %v725
  %v793 = vpop.f32.mrb[0].mxu0
  %v794 = vadd.f32 0.0, %v793
  %v795 = vpop.f32.mrb[0].mxu0
  %796 = vdwg.mxu0
  %797 = vrot.lane.b32.xlu0 %v209, 88
  %v798 = vpop.permute.xlu0 %797
  %v801 = vsel %vm216, %v720, 0
  %803 = vmatprep.subr.mxu0 0.0
  %804 = vmatpush1.msra.mxu0 %v798
  %805 = vmatprep.subr.mxu0 0.0
  %806 = vmatpush1.msra.mxu0 0.0
  %807 = vmatprep.subr.mxu0 0.0
  %808 = vmatpush1.msra.mxu0 0.0
  %809 = vmatprep.subr.mxu0 0.0
  %810 = vmatpush1.msra.mxu0 0.0
  %811 = vmatprep.subr.mxu0 0.0
  %812 = vmatpush1.msra.mxu0 0.0
  %813 = vmatprep.subr.mxu0 0.0
  %814 = vmatpush1.msra.mxu0 0.0
  %815 = vmatprep.subr.mxu0 0.0
  %816 = vmatpush1.msra.mxu0 0.0
  %817 = vmatprep.subr.mxu0 0.0
  %818 = vmatpush1.msra.mxu0 0.0
  %819 = vmatprep.subr.mxu0 0.0
  %820 = vmatpush1.msra.mxu0 0.0
  %821 = vmatprep.subr.mxu0 0.0
  %822 = vmatpush1.msra.mxu0 0.0
  %823 = vmatprep.subr.mxu0 0.0
  %824 = vmatpush1.msra.mxu0 0.0
  %825 = vmatprep.subr.mxu0 0.0
  %826 = vmatpush1.msra.mxu0 0.0
  %827 = vmatprep.subr.mxu0 0.0
  %828 = vmatpush1.msra.mxu0 0.0
  %829 = vmatprep.subr.mxu0 0.0
  %830 = vmatpush1.msra.mxu0 0.0
  %831 = vmatprep.subr.mxu0 0.0
  %832 = vmatpush1.msra.mxu0 0.0
  %833 = vmatprep.subr.mxu0 0.0
  %834 = vmatpush1.msra.mxu0 0.0
  %835 = vmatprep.subr.mxu0 0.0
  %836 = vmatpush1.msra.mxu0 0.0
  %837 = vmatprep.subr.mxu0 0.0
  %838 = vmatpush1.msra.mxu0 0.0
  %839 = vmatprep.subr.mxu0 0.0
  %840 = vmatpush1.msra.mxu0 0.0
  %841 = vmatprep.subr.mxu0 0.0
  %842 = vmatpush1.msra.mxu0 0.0
  %843 = vmatprep.subr.mxu0 0.0
  %844 = vmatpush1.msra.mxu0 0.0
  %845 = vmatprep.subr.mxu0 0.0
  %846 = vmatpush1.msra.mxu0 0.0
  %847 = vmatprep.subr.mxu0 0.0
  %848 = vmatpush1.msra.mxu0 0.0
  %849 = vmatprep.subr.mxu0 0.0
  %850 = vmatpush1.msra.mxu0 0.0
  %851 = vmatprep.subr.mxu0 0.0
  %852 = vmatpush1.msra.mxu0 0.0
  %853 = vmatprep.subr.mxu0 0.0
  %854 = vmatpush1.msra.mxu0 0.0
  %855 = vmatprep.subr.mxu0 0.0
  %856 = vmatpush1.msra.mxu0 0.0
  %857 = vmatprep.subr.mxu0 0.0
  %858 = vmatpush1.msra.mxu0 0.0
  %859 = vmatprep.subr.mxu0 0.0
  %860 = vmatpush1.msra.mxu0 0.0
  %861 = vmatprep.subr.mxu0 0.0
  %862 = vmatpush1.msra.mxu0 0.0
  %863 = vmatprep.subr.mxu0 0.0
  %864 = vmatpush1.msra.mxu0 0.0
  %865 = vmatprep.subr.mxu0 0.0
  %866 = vmatpush1.msra.mxu0 0.0
  %867 = vmatprep.mubr.f32.mxu0 0.0
  %868 = vmatmul.mubr.f32.gmra.mrb[0].mxu0 %v801
  %v869 = vpop.f32.mrb[0].mxu0
  %v870 = vadd.f32 0.0, %v869
  %v871 = vpop.f32.mrb[0].mxu0
  %872 = vdwg.mxu0
  %v874 = vsel %vm216, %v794, 0
  %v877 = vsel %vm216, %v870, 0
  %879 = vmatprep.subr.mxu0 0.0
  %880 = vmatpush1.msra.mxu0 %v213
  %881 = vmatprep.subr.mxu0 0.0
  %882 = vmatpush1.msra.mxu0 0.0
  %883 = vmatprep.subr.mxu0 0.0
  %884 = vmatpush1.msra.mxu0 0.0
  %885 = vmatprep.subr.mxu0 0.0
  %886 = vmatpush1.msra.mxu0 0.0
  %887 = vmatprep.subr.mxu0 0.0
  %888 = vmatpush1.msra.mxu0 0.0
  %889 = vmatprep.subr.mxu0 0.0
  %890 = vmatpush1.msra.mxu0 0.0
  %891 = vmatprep.subr.mxu0 0.0
  %892 = vmatpush1.msra.mxu0 0.0
  %893 = vmatprep.subr.mxu0 0.0
  %894 = vmatpush1.msra.mxu0 0.0
  %895 = vmatprep.subr.mxu0 0.0
  %896 = vmatpush1.msra.mxu0 0.0
  %897 = vmatprep.subr.mxu0 0.0
  %898 = vmatpush1.msra.mxu0 0.0
  %899 = vmatprep.subr.mxu0 0.0
  %900 = vmatpush1.msra.mxu0 0.0
  %901 = vmatprep.subr.mxu0 0.0
  %902 = vmatpush1.msra.mxu0 0.0
  %903 = vmatprep.subr.mxu0 0.0
  %904 = vmatpush1.msra.mxu0 0.0
  %905 = vmatprep.subr.mxu0 0.0
  %906 = vmatpush1.msra.mxu0 0.0
  %907 = vmatprep.subr.mxu0 0.0
  %908 = vmatpush1.msra.mxu0 0.0
  %909 = vmatprep.subr.mxu0 0.0
  %910 = vmatpush1.msra.mxu0 0.0
  %911 = vmatprep.subr.mxu0 0.0
  %912 = vmatpush1.msra.mxu0 0.0
  %913 = vmatprep.subr.mxu0 0.0
  %914 = vmatpush1.msra.mxu0 0.0
  %915 = vmatprep.subr.mxu0 0.0
  %916 = vmatpush1.msra.mxu0 0.0
  %917 = vmatprep.subr.mxu0 0.0
  %918 = vmatpush1.msra.mxu0 0.0
  %919 = vmatprep.subr.mxu0 0.0
  %920 = vmatpush1.msra.mxu0 0.0
  %921 = vmatprep.subr.mxu0 0.0
  %922 = vmatpush1.msra.mxu0 0.0
  %923 = vmatprep.subr.mxu0 0.0
  %924 = vmatpush1.msra.mxu0 0.0
  %925 = vmatprep.subr.mxu0 0.0
  %926 = vmatpush1.msra.mxu0 0.0
  %927 = vmatprep.subr.mxu0 0.0
  %928 = vmatpush1.msra.mxu0 0.0
  %929 = vmatprep.subr.mxu0 0.0
  %930 = vmatpush1.msra.mxu0 0.0
  %931 = vmatprep.subr.mxu0 0.0
  %932 = vmatpush1.msra.mxu0 0.0
  %933 = vmatprep.subr.mxu0 0.0
  %934 = vmatpush1.msra.mxu0 0.0
  %935 = vmatprep.subr.mxu0 0.0
  %936 = vmatpush1.msra.mxu0 0.0
  %937 = vmatprep.subr.mxu0 0.0
  %938 = vmatpush1.msra.mxu0 0.0
  %939 = vmatprep.subr.mxu0 0.0
  %940 = vmatpush1.msra.mxu0 0.0
  %941 = vmatprep.subr.mxu0 0.0
  %942 = vmatpush1.msra.mxu0 0.0
  %943 = vmatprep.mubr.f32.mxu0 0.0
  %944 = vmatmul.mubr.f32.gmra.mrb[0].mxu0 %v874
  %v945 = vpop.f32.mrb[0].mxu0
  %v946 = vadd.f32 0.0, %v945
  %v947 = vpop.f32.mrb[0].mxu0
  %948 = vmatprep.mubr.f32.mxu0 0.0
  %949 = vmatmul.mubr.f32.gmra.mrb[0].mxu0 %v877
  %v950 = vpop.f32.mrb[0].mxu0
  %v951 = vadd.f32 0.0, %v950
  %v952 = vpop.f32.mrb[0].mxu0
  %953 = vdwg.mxu0
  %v955 = vsel %vm216, %v464, 0
  %v958 = vsel %vm216, %v540, 0
  %960 = vmatprep.subr.mxu0 0.0
  %961 = vmatpush1.msra.mxu0 %v212
  %962 = vmatprep.subr.mxu0 0.0
  %963 = vmatpush1.msra.mxu0 0.0
  %964 = vmatprep.subr.mxu0 0.0
  %965 = vmatpush1.msra.mxu0 0.0
  %966 = vmatprep.subr.mxu0 0.0
  %967 = vmatpush1.msra.mxu0 0.0
  %968 = vmatprep.subr.mxu0 0.0
  %969 = vmatpush1.msra.mxu0 0.0
  %970 = vmatprep.subr.mxu0 0.0
  %971 = vmatpush1.msra.mxu0 0.0
  %972 = vmatprep.subr.mxu0 0.0
  %973 = vmatpush1.msra.mxu0 0.0
  %974 = vmatprep.subr.mxu0 0.0
  %975 = vmatpush1.msra.mxu0 0.0
  %976 = vmatprep.subr.mxu0 0.0
  %977 = vmatpush1.msra.mxu0 0.0
  %978 = vmatprep.subr.mxu0 0.0
  %979 = vmatpush1.msra.mxu0 0.0
  %980 = vmatprep.subr.mxu0 0.0
  %981 = vmatpush1.msra.mxu0 0.0
  %982 = vmatprep.subr.mxu0 0.0
  %983 = vmatpush1.msra.mxu0 0.0
  %984 = vmatprep.subr.mxu0 0.0
  %985 = vmatpush1.msra.mxu0 0.0
  %986 = vmatprep.subr.mxu0 0.0
  %987 = vmatpush1.msra.mxu0 0.0
  %988 = vmatprep.subr.mxu0 0.0
  %989 = vmatpush1.msra.mxu0 0.0
  %990 = vmatprep.subr.mxu0 0.0
  %991 = vmatpush1.msra.mxu0 0.0
  %992 = vmatprep.subr.mxu0 0.0
  %993 = vmatpush1.msra.mxu0 0.0
  %994 = vmatprep.subr.mxu0 0.0
  %995 = vmatpush1.msra.mxu0 0.0
  %996 = vmatprep.subr.mxu0 0.0
  %997 = vmatpush1.msra.mxu0 0.0
  %998 = vmatprep.subr.mxu0 0.0
  %999 = vmatpush1.msra.mxu0 0.0
  %1000 = vmatprep.subr.mxu0 0.0
  %1001 = vmatpush1.msra.mxu0 0.0
  %1002 = vmatprep.subr.mxu0 0.0
  %1003 = vmatpush1.msra.mxu0 0.0
  %1004 = vmatprep.subr.mxu0 0.0
  %1005 = vmatpush1.msra.mxu0 0.0
  %1006 = vmatprep.subr.mxu0 0.0
  %1007 = vmatpush1.msra.mxu0 0.0
  %1008 = vmatprep.subr.mxu0 0.0
  %1009 = vmatpush1.msra.mxu0 0.0
  %1010 = vmatprep.subr.mxu0 0.0
  %1011 = vmatpush1.msra.mxu0 0.0
  %1012 = vmatprep.subr.mxu0 0.0
  %1013 = vmatpush1.msra.mxu0 0.0
  %1014 = vmatprep.subr.mxu0 0.0
  %1015 = vmatpush1.msra.mxu0 0.0
  %1016 = vmatprep.subr.mxu0 0.0
  %1017 = vmatpush1.msra.mxu0 0.0
  %1018 = vmatprep.subr.mxu0 0.0
  %1019 = vmatpush1.msra.mxu0 0.0
  %1020 = vmatprep.subr.mxu0 0.0
  %1021 = vmatpush1.msra.mxu0 0.0
  %1022 = vmatprep.subr.mxu0 0.0
  %1023 = vmatpush1.msra.mxu0 0.0
  %1024 = vmatprep.mubr.f32.mxu0 0.0
  %1025 = vmatmul.mubr.f32.gmra.mrb[0].mxu0 %v955
  %v1026 = vpop.f32.mrb[0].mxu0
  %v1027 = vadd.f32 %v946, %v1026
  %v1028 = vpop.f32.mrb[0].mxu0
  %1029 = vmatprep.mubr.f32.mxu0 0.0
  %1030 = vmatmul.mubr.f32.gmra.mrb[0].mxu0 %v958
  %v1031 = vpop.f32.mrb[0].mxu0
  %v1032 = vadd.f32 %v951, %v1031
  %v1033 = vpop.f32.mrb[0].mxu0
  %1034 = vdwg.mxu0
  %1035 = vrot.lane.b32.xlu0 %v113, 112
  %v1036 = vpop.permute.xlu0 %1035
  %1037 = vrot.lane.b32.xlu0 %v204, 112
  %v1038 = vpop.permute.xlu0 %1037
  %v1039 = vsel %vm216, %v1036, 0
  %v1041 = vsel %vm216, %v1038, 0
  %1043 = vmatprep.subr.mxu0 0.0
  %1044 = vmatpush1.xpose.msra.mxu0 %v1041
  %1045 = vmatprep.subr.mxu0 0.0
  %1046 = vmatpush1.xpose.msra.mxu0 0.0
  %1047 = vmatprep.subr.mxu0 0.0
  %1048 = vmatpush1.xpose.msra.mxu0 0.0
  %1049 = vmatprep.subr.mxu0 0.0
  %1050 = vmatpush1.xpose.msra.mxu0 0.0
  %1051 = vmatprep.subr.mxu0 0.0
  %1052 = vmatpush1.xpose.msra.mxu0 0.0
  %1053 = vmatprep.subr.mxu0 0.0
  %1054 = vmatpush1.xpose.msra.mxu0 0.0
  %1055 = vmatprep.subr.mxu0 0.0
  %1056 = vmatpush1.xpose.msra.mxu0 0.0
  %1057 = vmatprep.subr.mxu0 0.0
  %1058 = vmatpush1.xpose.msra.mxu0 0.0
  %1059 = vmatprep.subr.mxu0 0.0
  %1060 = vmatpush1.xpose.msra.mxu0 0.0
  %1061 = vmatprep.subr.mxu0 0.0
  %1062 = vmatpush1.xpose.msra.mxu0 0.0
  %1063 = vmatprep.subr.mxu0 0.0
  %1064 = vmatpush1.xpose.msra.mxu0 0.0
  %1065 = vmatprep.subr.mxu0 0.0
  %1066 = vmatpush1.xpose.msra.mxu0 0.0
  %1067 = vmatprep.subr.mxu0 0.0
  %1068 = vmatpush1.xpose.msra.mxu0 0.0
  %1069 = vmatprep.subr.mxu0 0.0
  %1070 = vmatpush1.xpose.msra.mxu0 0.0
  %1071 = vmatprep.subr.mxu0 0.0
  %1072 = vmatpush1.xpose.msra.mxu0 0.0
  %1073 = vmatprep.subr.mxu0 0.0
  %1074 = vmatpush1.xpose.msra.mxu0 0.0
  %1075 = vmatprep.subr.mxu0 0.0
  %1076 = vmatpush1.xpose.msra.mxu0 0.0
  %1077 = vmatprep.subr.mxu0 0.0
  %1078 = vmatpush1.xpose.msra.mxu0 0.0
  %1079 = vmatprep.subr.mxu0 0.0
  %1080 = vmatpush1.xpose.msra.mxu0 0.0
  %1081 = vmatprep.subr.mxu0 0.0
  %1082 = vmatpush1.xpose.msra.mxu0 0.0
  %1083 = vmatprep.subr.mxu0 0.0
  %1084 = vmatpush1.xpose.msra.mxu0 0.0
  %1085 = vmatprep.subr.mxu0 0.0
  %1086 = vmatpush1.xpose.msra.mxu0 0.0
  %1087 = vmatprep.subr.mxu0 0.0
  %1088 = vmatpush1.xpose.msra.mxu0 0.0
  %1089 = vmatprep.subr.mxu0 0.0
  %1090 = vmatpush1.xpose.msra.mxu0 0.0
  %1091 = vmatprep.subr.mxu0 0.0
  %1092 = vmatpush1.xpose.msra.mxu0 0.0
  %1093 = vmatprep.subr.mxu0 0.0
  %1094 = vmatpush1.xpose.msra.mxu0 0.0
  %1095 = vmatprep.subr.mxu0 0.0
  %1096 = vmatpush1.xpose.msra.mxu0 0.0
  %1097 = vmatprep.subr.mxu0 0.0
  %1098 = vmatpush1.xpose.msra.mxu0 0.0
  %1099 = vmatprep.subr.mxu0 0.0
  %1100 = vmatpush1.xpose.msra.mxu0 0.0
  %1101 = vmatprep.subr.mxu0 0.0
  %1102 = vmatpush1.xpose.msra.mxu0 0.0
  %1103 = vmatprep.subr.mxu0 0.0
  %1104 = vmatpush1.xpose.msra.mxu0 0.0
  %1105 = vmatprep.subr.mxu0 0.0
  %1106 = vmatpush1.xpose.msra.mxu0 0.0
  %1107 = vmatprep.mubr.f32.mxu0 0.0
  %1108 = vmatmul.mubr.f32.gmra.mrb[0].mxu0 %v1039
  %v1109 = vpop.f32.mrb[0].mxu0
  %v1110 = vadd.f32 0.0, %v1109
  %v1111 = vpop.f32.mrb[0].mxu0
  %1112 = vdwg.mxu0
  %1113 = vrot.lane.b32.xlu0 %v118, 112
  %v1114 = vpop.permute.xlu0 %1113
  %1115 = vrot.lane.b32.xlu0 %v209, 112
  %v1116 = vpop.permute.xlu0 %1115
  %v1117 = vsel %vm216, %v1114, 0
  %v1119 = vsel %vm216, %v1116, 0
  %1121 = vmatprep.subr.mxu0 0.0
  %1122 = vmatpush1.xpose.msra.mxu0 %v1119
  %1123 = vmatprep.subr.mxu0 0.0
  %1124 = vmatpush1.xpose.msra.mxu0 0.0
  %1125 = vmatprep.subr.mxu0 0.0
  %1126 = vmatpush1.xpose.msra.mxu0 0.0
  %1127 = vmatprep.subr.mxu0 0.0
  %1128 = vmatpush1.xpose.msra.mxu0 0.0
  %1129 = vmatprep.subr.mxu0 0.0
  %1130 = vmatpush1.xpose.msra.mxu0 0.0
  %1131 = vmatprep.subr.mxu0 0.0
  %1132 = vmatpush1.xpose.msra.mxu0 0.0
  %1133 = vmatprep.subr.mxu0 0.0
  %1134 = vmatpush1.xpose.msra.mxu0 0.0
  %1135 = vmatprep.subr.mxu0 0.0
  %1136 = vmatpush1.xpose.msra.mxu0 0.0
  %1137 = vmatprep.subr.mxu0 0.0
  %1138 = vmatpush1.xpose.msra.mxu0 0.0
  %1139 = vmatprep.subr.mxu0 0.0
  %1140 = vmatpush1.xpose.msra.mxu0 0.0
  %1141 = vmatprep.subr.mxu0 0.0
  %1142 = vmatpush1.xpose.msra.mxu0 0.0
  %1143 = vmatprep.subr.mxu0 0.0
  %1144 = vmatpush1.xpose.msra.mxu0 0.0
  %1145 = vmatprep.subr.mxu0 0.0
  %1146 = vmatpush1.xpose.msra.mxu0 0.0
  %1147 = vmatprep.subr.mxu0 0.0
  %1148 = vmatpush1.xpose.msra.mxu0 0.0
  %1149 = vmatprep.subr.mxu0 0.0
  %1150 = vmatpush1.xpose.msra.mxu0 0.0
  %1151 = vmatprep.subr.mxu0 0.0
  %1152 = vmatpush1.xpose.msra.mxu0 0.0
  %1153 = vmatprep.subr.mxu0 0.0
  %1154 = vmatpush1.xpose.msra.mxu0 0.0
  %1155 = vmatprep.subr.mxu0 0.0
  %1156 = vmatpush1.xpose.msra.mxu0 0.0
  %1157 = vmatprep.subr.mxu0 0.0
  %1158 = vmatpush1.xpose.msra.mxu0 0.0
  %1159 = vmatprep.subr.mxu0 0.0
  %1160 = vmatpush1.xpose.msra.mxu0 0.0
  %1161 = vmatprep.subr.mxu0 0.0
  %1162 = vmatpush1.xpose.msra.mxu0 0.0
  %1163 = vmatprep.subr.mxu0 0.0
  %1164 = vmatpush1.xpose.msra.mxu0 0.0
  %1165 = vmatprep.subr.mxu0 0.0
  %1166 = vmatpush1.xpose.msra.mxu0 0.0
  %1167 = vmatprep.subr.mxu0 0.0
  %1168 = vmatpush1.xpose.msra.mxu0 0.0
  %1169 = vmatprep.subr.mxu0 0.0
  %1170 = vmatpush1.xpose.msra.mxu0 0.0
  %1171 = vmatprep.subr.mxu0 0.0
  %1172 = vmatpush1.xpose.msra.mxu0 0.0
  %1173 = vmatprep.subr.mxu0 0.0
  %1174 = vmatpush1.xpose.msra.mxu0 0.0
  %1175 = vmatprep.subr.mxu0 0.0
  %1176 = vmatpush1.xpose.msra.mxu0 0.0
  %1177 = vmatprep.subr.mxu0 0.0
  %1178 = vmatpush1.xpose.msra.mxu0 0.0
  %1179 = vmatprep.subr.mxu0 0.0
  %1180 = vmatpush1.xpose.msra.mxu0 0.0
  %1181 = vmatprep.subr.mxu0 0.0
  %1182 = vmatpush1.xpose.msra.mxu0 0.0
  %1183 = vmatprep.subr.mxu0 0.0
  %1184 = vmatpush1.xpose.msra.mxu0 0.0
  %1185 = vmatprep.mubr.f32.mxu0 0.0
  %1186 = vmatmul.mubr.f32.gmra.mrb[0].mxu0 %v1117
  %v1187 = vpop.f32.mrb[0].mxu0
  %v1188 = vadd.f32 0.0, %v1187
  %v1189 = vpop.f32.mrb[0].mxu0
  %1190 = vdwg.mxu0
  %v1191 = vsel %vm216, %v1110, -inf
  %1192 = vmax.xlane.f32.xlu0 %v1191
  %v1193 = vpop.xlane.xlu0 %1192
  %v1194 = vsel %vm216, %v1188, -inf
  %1195 = vmax.xlane.f32.xlu0 %v1194
  %v1196 = vpop.xlane.xlu0 %1195
  %v1197 = vsub.f32 %v1110, %v1193
  %v1198 = vsub.f32 %v1188, %v1196
  %v1199 = vmul.f32 %v1197, 1.442695
  %v1200 = vpow.pop %v1199
  %v1201 = vmul.f32 %v1198, 1.442695
  %v1202 = vpow.pop %v1201
  %v1203 = vsel %vm216, %v1200, 0.0
  %1204 = vadd.xlane.f32.xlu0 %v1203
  %v1205 = vpop.xlane.xlu0 %1204
  %v1206 = vsel %vm216, %v1202, 0.0
  %1207 = vadd.xlane.f32.xlu0 %v1206
  %v1208 = vpop.xlane.xlu0 %1207
  %v1209 = vrcp.pop %v1205
  %v1210 = vrcp.pop %v1208
  %v1211 = vmul.f32 %v1200, %v1209
  %v1212 = vmul.f32 %v1202, %v1210
  %1213 = vrot.lane.b32.xlu0 %v204, 80
  %v1214 = vpop.permute.xlu0 %1213
  %v1217 = vsel %vm216, %v1211, 0
  %1219 = vmatprep.subr.mxu0 0.0
  %1220 = vmatpush1.msra.mxu0 %v1214
  %1221 = vmatprep.subr.mxu0 0.0
  %1222 = vmatpush1.msra.mxu0 0.0
  %1223 = vmatprep.subr.mxu0 0.0
  %1224 = vmatpush1.msra.mxu0 0.0
  %1225 = vmatprep.subr.mxu0 0.0
  %1226 = vmatpush1.msra.mxu0 0.0
  %1227 = vmatprep.subr.mxu0 0.0
  %1228 = vmatpush1.msra.mxu0 0.0
  %1229 = vmatprep.subr.mxu0 0.0
  %1230 = vmatpush1.msra.mxu0 0.0
  %1231 = vmatprep.subr.mxu0 0.0
  %1232 = vmatpush1.msra.mxu0 0.0
  %1233 = vmatprep.subr.mxu0 0.0
  %1234 = vmatpush1.msra.mxu0 0.0
  %1235 = vmatprep.subr.mxu0 0.0
  %1236 = vmatpush1.msra.mxu0 0.0
  %1237 = vmatprep.subr.mxu0 0.0
  %1238 = vmatpush1.msra.mxu0 0.0
  %1239 = vmatprep.subr.mxu0 0.0
  %1240 = vmatpush1.msra.mxu0 0.0
  %1241 = vmatprep.subr.mxu0 0.0
  %1242 = vmatpush1.msra.mxu0 0.0
  %1243 = vmatprep.subr.mxu0 0.0
  %1244 = vmatpush1.msra.mxu0 0.0
  %1245 = vmatprep.subr.mxu0 0.0
  %1246 = vmatpush1.msra.mxu0 0.0
  %1247 = vmatprep.subr.mxu0 0.0
  %1248 = vmatpush1.msra.mxu0 0.0
  %1249 = vmatprep.subr.mxu0 0.0
  %1250 = vmatpush1.msra.mxu0 0.0
  %1251 = vmatprep.subr.mxu0 0.0
  %1252 = vmatpush1.msra.mxu0 0.0
  %1253 = vmatprep.subr.mxu0 0.0
  %1254 = vmatpush1.msra.mxu0 0.0
  %1255 = vmatprep.subr.mxu0 0.0
  %1256 = vmatpush1.msra.mxu0 0.0
  %1257 = vmatprep.subr.mxu0 0.0
  %1258 = vmatpush1.msra.mxu0 0.0
  %1259 = vmatprep.subr.mxu0 0.0
  %1260 = vmatpush1.msra.mxu0 0.0
  %1261 = vmatprep.subr.mxu0 0.0
  %1262 = vmatpush1.msra.mxu0 0.0
  %1263 = vmatprep.subr.mxu0 0.0
  %1264 = vmatpush1.msra.mxu0 0.0
  %1265 = vmatprep.subr.mxu0 0.0
  %1266 = vmatpush1.msra.mxu0 0.0
  %1267 = vmatprep.subr.mxu0 0.0
  %1268 = vmatpush1.msra.mxu0 0.0
  %1269 = vmatprep.subr.mxu0 0.0
  %1270 = vmatpush1.msra.mxu0 0.0
  %1271 = vmatprep.subr.mxu0 0.0
  %1272 = vmatpush1.msra.mxu0 0.0
  %1273 = vmatprep.subr.mxu0 0.0
  %1274 = vmatpush1.msra.mxu0 0.0
  %1275 = vmatprep.subr.mxu0 0.0
  %1276 = vmatpush1.msra.mxu0 0.0
  %1277 = vmatprep.subr.mxu0 0.0
  %1278 = vmatpush1.msra.mxu0 0.0
  %1279 = vmatprep.subr.mxu0 0.0
  %1280 = vmatpush1.msra.mxu0 0.0
  %1281 = vmatprep.subr.mxu0 0.0
  %1282 = vmatpush1.msra.mxu0 0.0
  %1283 = vmatprep.mubr.f32.mxu0 0.0
  %1284 = vmatmul.mubr.f32.gmra.mrb[0].mxu0 %v1217
  %v1285 = vpop.f32.mrb[0].mxu0
  %v1286 = vadd.f32 0.0, %v1285
  %v1287 = vpop.f32.mrb[0].mxu0
  %1288 = vdwg.mxu0
  %1289 = vrot.lane.b32.xlu0 %v209, 80
  %v1290 = vpop.permute.xlu0 %1289
  %v1293 = vsel %vm216, %v1212, 0
  %1295 = vmatprep.subr.mxu0 0.0
  %1296 = vmatpush1.msra.mxu0 %v1290
  %1297 = vmatprep.subr.mxu0 0.0
  %1298 = vmatpush1.msra.mxu0 0.0
  %1299 = vmatprep.subr.mxu0 0.0
  %1300 = vmatpush1.msra.mxu0 0.0
  %1301 = vmatprep.subr.mxu0 0.0
  %1302 = vmatpush1.msra.mxu0 0.0
  %1303 = vmatprep.subr.mxu0 0.0
  %1304 = vmatpush1.msra.mxu0 0.0
  %1305 = vmatprep.subr.mxu0 0.0
  %1306 = vmatpush1.msra.mxu0 0.0
  %1307 = vmatprep.subr.mxu0 0.0
  %1308 = vmatpush1.msra.mxu0 0.0
  %1309 = vmatprep.subr.mxu0 0.0
  %1310 = vmatpush1.msra.mxu0 0.0
  %1311 = vmatprep.subr.mxu0 0.0
  %1312 = vmatpush1.msra.mxu0 0.0
  %1313 = vmatprep.subr.mxu0 0.0
  %1314 = vmatpush1.msra.mxu0 0.0
  %1315 = vmatprep.subr.mxu0 0.0
  %1316 = vmatpush1.msra.mxu0 0.0
  %1317 = vmatprep.subr.mxu0 0.0
  %1318 = vmatpush1.msra.mxu0 0.0
  %1319 = vmatprep.subr.mxu0 0.0
  %1320 = vmatpush1.msra.mxu0 0.0
  %1321 = vmatprep.subr.mxu0 0.0
  %1322 = vmatpush1.msra.mxu0 0.0
  %1323 = vmatprep.subr.mxu0 0.0
  %1324 = vmatpush1.msra.mxu0 0.0
  %1325 = vmatprep.subr.mxu0 0.0
  %1326 = vmatpush1.msra.mxu0 0.0
  %1327 = vmatprep.subr.mxu0 0.0
  %1328 = vmatpush1.msra.mxu0 0.0
  %1329 = vmatprep.subr.mxu0 0.0
  %1330 = vmatpush1.msra.mxu0 0.0
  %1331 = vmatprep.subr.mxu0 0.0
  %1332 = vmatpush1.msra.mxu0 0.0
  %1333 = vmatprep.subr.mxu0 0.0
  %1334 = vmatpush1.msra.mxu0 0.0
  %1335 = vmatprep.subr.mxu0 0.0
  %1336 = vmatpush1.msra.mxu0 0.0
  %1337 = vmatprep.subr.mxu0 0.0
  %1338 = vmatpush1.msra.mxu0 0.0
  %1339 = vmatprep.subr.mxu0 0.0
  %1340 = vmatpush1.msra.mxu0 0.0
  %1341 = vmatprep.subr.mxu0 0.0
  %1342 = vmatpush1.msra.mxu0 0.0
  %1343 = vmatprep.subr.mxu0 0.0
  %1344 = vmatpush1.msra.mxu0 0.0
  %1345 = vmatprep.subr.mxu0 0.0
  %1346 = vmatpush1.msra.mxu0 0.0
  %1347 = vmatprep.subr.mxu0 0.0
  %1348 = vmatpush1.msra.mxu0 0.0
  %1349 = vmatprep.subr.mxu0 0.0
  %1350 = vmatpush1.msra.mxu0 0.0
  %1351 = vmatprep.subr.mxu0 0.0
  %1352 = vmatpush1.msra.mxu0 0.0
  %1353 = vmatprep.subr.mxu0 0.0
  %1354 = vmatpush1.msra.mxu0 0.0
  %1355 = vmatprep.subr.mxu0 0.0
  %1356 = vmatpush1.msra.mxu0 0.0
  %1357 = vmatprep.subr.mxu0 0.0
  %1358 = vmatpush1.msra.mxu0 0.0
  %1359 = vmatprep.mubr.f32.mxu0 0.0
  %1360 = vmatmul.mubr.f32.gmra.mrb[0].mxu0 %v1293
  %v1361 = vpop.f32.mrb[0].mxu0
  %v1362 = vadd.f32 0.0, %v1361
  %v1363 = vpop.f32.mrb[0].mxu0
  %1364 = vdwg.mxu0
  %v1366 = vsel %vm216, %v1286, 0
  %v1369 = vsel %vm216, %v1362, 0
  %1371 = vmatprep.subr.mxu0 0.0
  %1372 = vmatpush1.msra.mxu0 %v214
  %1373 = vmatprep.subr.mxu0 0.0
  %1374 = vmatpush1.msra.mxu0 0.0
  %1375 = vmatprep.subr.mxu0 0.0
  %1376 = vmatpush1.msra.mxu0 0.0
  %1377 = vmatprep.subr.mxu0 0.0
  %1378 = vmatpush1.msra.mxu0 0.0
  %1379 = vmatprep.subr.mxu0 0.0
  %1380 = vmatpush1.msra.mxu0 0.0
  %1381 = vmatprep.subr.mxu0 0.0
  %1382 = vmatpush1.msra.mxu0 0.0
  %1383 = vmatprep.subr.mxu0 0.0
  %1384 = vmatpush1.msra.mxu0 0.0
  %1385 = vmatprep.subr.mxu0 0.0
  %1386 = vmatpush1.msra.mxu0 0.0
  %1387 = vmatprep.subr.mxu0 0.0
  %1388 = vmatpush1.msra.mxu0 0.0
  %1389 = vmatprep.subr.mxu0 0.0
  %1390 = vmatpush1.msra.mxu0 0.0
  %1391 = vmatprep.subr.mxu0 0.0
  %1392 = vmatpush1.msra.mxu0 0.0
  %1393 = vmatprep.subr.mxu0 0.0
  %1394 = vmatpush1.msra.mxu0 0.0
  %1395 = vmatprep.subr.mxu0 0.0
  %1396 = vmatpush1.msra.mxu0 0.0
  %1397 = vmatprep.subr.mxu0 0.0
  %1398 = vmatpush1.msra.mxu0 0.0
  %1399 = vmatprep.subr.mxu0 0.0
  %1400 = vmatpush1.msra.mxu0 0.0
  %1401 = vmatprep.subr.mxu0 0.0
  %1402 = vmatpush1.msra.mxu0 0.0
  %1403 = vmatprep.subr.mxu0 0.0
  %1404 = vmatpush1.msra.mxu0 0.0
  %1405 = vmatprep.subr.mxu0 0.0
  %1406 = vmatpush1.msra.mxu0 0.0
  %1407 = vmatprep.subr.mxu0 0.0
  %1408 = vmatpush1.msra.mxu0 0.0
  %1409 = vmatprep.subr.mxu0 0.0
  %1410 = vmatpush1.msra.mxu0 0.0
  %1411 = vmatprep.subr.mxu0 0.0
  %1412 = vmatpush1.msra.mxu0 0.0
  %1413 = vmatprep.subr.mxu0 0.0
  %1414 = vmatpush1.msra.mxu0 0.0
  %1415 = vmatprep.subr.mxu0 0.0
  %1416 = vmatpush1.msra.mxu0 0.0
  %1417 = vmatprep.subr.mxu0 0.0
  %1418 = vmatpush1.msra.mxu0 0.0
  %1419 = vmatprep.subr.mxu0 0.0
  %1420 = vmatpush1.msra.mxu0 0.0
  %1421 = vmatprep.subr.mxu0 0.0
  %1422 = vmatpush1.msra.mxu0 0.0
  %1423 = vmatprep.subr.mxu0 0.0
  %1424 = vmatpush1.msra.mxu0 0.0
  %1425 = vmatprep.subr.mxu0 0.0
  %1426 = vmatpush1.msra.mxu0 0.0
  %1427 = vmatprep.subr.mxu0 0.0
  %1428 = vmatpush1.msra.mxu0 0.0
  %1429 = vmatprep.subr.mxu0 0.0
  %1430 = vmatpush1.msra.mxu0 0.0
  %1431 = vmatprep.subr.mxu0 0.0
  %1432 = vmatpush1.msra.mxu0 0.0
  %1433 = vmatprep.subr.mxu0 0.0
  %1434 = vmatpush1.msra.mxu0 0.0
  %1435 = vmatprep.mubr.f32.mxu0 0.0
  %1436 = vmatmul.mubr.f32.gmra.mrb[0].mxu0 %v1366
  %v1437 = vpop.f32.mrb[0].mxu0
  %v1438 = vadd.f32 0.0, %v1437
  %v1439 = vpop.f32.mrb[0].mxu0
  %1440 = vmatprep.mubr.f32.mxu0 0.0
  %1441 = vmatmul.mubr.f32.gmra.mrb[0].mxu0 %v1369
  %v1442 = vpop.f32.mrb[0].mxu0
  %v1443 = vadd.f32 0.0, %v1442
  %v1444 = vpop.f32.mrb[0].mxu0
  %1445 = vdwg.mxu0
  %v1446 = vadd.f32 %v1027, %v1438
  %v1447 = vadd.f32 %v1032, %v1443
  %1448 = vrot.lane.b32.xlu0 %v113, 104
  %v1449 = vpop.permute.xlu0 %1448
  %1450 = vrot.lane.b32.xlu0 %v204, 104
  %v1451 = vpop.permute.xlu0 %1450
  %v1452 = vsel %vm216, %v1449, 0
  %v1454 = vsel %vm216, %v1451, 0
  %1456 = vmatprep.subr.mxu0 0.0
  %1457 = vmatpush1.xpose.msra.mxu0 %v1454
  %1458 = vmatprep.subr.mxu0 0.0
  %1459 = vmatpush1.xpose.msra.mxu0 0.0
  %1460 = vmatprep.subr.mxu0 0.0
  %1461 = vmatpush1.xpose.msra.mxu0 0.0
  %1462 = vmatprep.subr.mxu0 0.0
  %1463 = vmatpush1.xpose.msra.mxu0 0.0
  %1464 = vmatprep.subr.mxu0 0.0
  %1465 = vmatpush1.xpose.msra.mxu0 0.0
  %1466 = vmatprep.subr.mxu0 0.0
  %1467 = vmatpush1.xpose.msra.mxu0 0.0
  %1468 = vmatprep.subr.mxu0 0.0
  %1469 = vmatpush1.xpose.msra.mxu0 0.0
  %1470 = vmatprep.subr.mxu0 0.0
  %1471 = vmatpush1.xpose.msra.mxu0 0.0
  %1472 = vmatprep.subr.mxu0 0.0
  %1473 = vmatpush1.xpose.msra.mxu0 0.0
  %1474 = vmatprep.subr.mxu0 0.0
  %1475 = vmatpush1.xpose.msra.mxu0 0.0
  %1476 = vmatprep.subr.mxu0 0.0
  %1477 = vmatpush1.xpose.msra.mxu0 0.0
  %1478 = vmatprep.subr.mxu0 0.0
  %1479 = vmatpush1.xpose.msra.mxu0 0.0
  %1480 = vmatprep.subr.mxu0 0.0
  %1481 = vmatpush1.xpose.msra.mxu0 0.0
  %1482 = vmatprep.subr.mxu0 0.0
  %1483 = vmatpush1.xpose.msra.mxu0 0.0
  %1484 = vmatprep.subr.mxu0 0.0
  %1485 = vmatpush1.xpose.msra.mxu0 0.0
  %1486 = vmatprep.subr.mxu0 0.0
  %1487 = vmatpush1.xpose.msra.mxu0 0.0
  %1488 = vmatprep.subr.mxu0 0.0
  %1489 = vmatpush1.xpose.msra.mxu0 0.0
  %1490 = vmatprep.subr.mxu0 0.0
  %1491 = vmatpush1.xpose.msra.mxu0 0.0
  %1492 = vmatprep.subr.mxu0 0.0
  %1493 = vmatpush1.xpose.msra.mxu0 0.0
  %1494 = vmatprep.subr.mxu0 0.0
  %1495 = vmatpush1.xpose.msra.mxu0 0.0
  %1496 = vmatprep.subr.mxu0 0.0
  %1497 = vmatpush1.xpose.msra.mxu0 0.0
  %1498 = vmatprep.subr.mxu0 0.0
  %1499 = vmatpush1.xpose.msra.mxu0 0.0
  %1500 = vmatprep.subr.mxu0 0.0
  %1501 = vmatpush1.xpose.msra.mxu0 0.0
  %1502 = vmatprep.subr.mxu0 0.0
  %1503 = vmatpush1.xpose.msra.mxu0 0.0
  %1504 = vmatprep.subr.mxu0 0.0
  %1505 = vmatpush1.xpose.msra.mxu0 0.0
  %1506 = vmatprep.subr.mxu0 0.0
  %1507 = vmatpush1.xpose.msra.mxu0 0.0
  %1508 = vmatprep.subr.mxu0 0.0
  %1509 = vmatpush1.xpose.msra.mxu0 0.0
  %1510 = vmatprep.subr.mxu0 0.0
  %1511 = vmatpush1.xpose.msra.mxu0 0.0
  %1512 = vmatprep.subr.mxu0 0.0
  %1513 = vmatpush1.xpose.msra.mxu0 0.0
  %1514 = vmatprep.subr.mxu0 0.0
  %1515 = vmatpush1.xpose.msra.mxu0 0.0
  %1516 = vmatprep.subr.mxu0 0.0
  %1517 = vmatpush1.xpose.msra.mxu0 0.0
  %1518 = vmatprep.subr.mxu0 0.0
  %1519 = vmatpush1.xpose.msra.mxu0 0.0
  %1520 = vmatprep.mubr.f32.mxu0 0.0
  %1521 = vmatmul.mubr.f32.gmra.mrb[0].mxu0 %v1452
  %v1522 = vpop.f32.mrb[0].mxu0
  %v1523 = vadd.f32 0.0, %v1522
  %v1524 = vpop.f32.mrb[0].mxu0
  %1525 = vdwg.mxu0
  %1526 = vrot.lane.b32.xlu0 %v118, 104
  %v1527 = vpop.permute.xlu0 %1526
  %1528 = vrot.lane.b32.xlu0 %v209, 104
  %v1529 = vpop.permute.xlu0 %1528
  %v1530 = vsel %vm216, %v1527, 0
  %v1532 = vsel %vm216, %v1529, 0
  %1534 = vmatprep.subr.mxu0 0.0
  %1535 = vmatpush1.xpose.msra.mxu0 %v1532
  %1536 = vmatprep.subr.mxu0 0.0
  %1537 = vmatpush1.xpose.msra.mxu0 0.0
  %1538 = vmatprep.subr.mxu0 0.0
  %1539 = vmatpush1.xpose.msra.mxu0 0.0
  %1540 = vmatprep.subr.mxu0 0.0
  %1541 = vmatpush1.xpose.msra.mxu0 0.0
  %1542 = vmatprep.subr.mxu0 0.0
  %1543 = vmatpush1.xpose.msra.mxu0 0.0
  %1544 = vmatprep.subr.mxu0 0.0
  %1545 = vmatpush1.xpose.msra.mxu0 0.0
  %1546 = vmatprep.subr.mxu0 0.0
  %1547 = vmatpush1.xpose.msra.mxu0 0.0
  %1548 = vmatprep.subr.mxu0 0.0
  %1549 = vmatpush1.xpose.msra.mxu0 0.0
  %1550 = vmatprep.subr.mxu0 0.0
  %1551 = vmatpush1.xpose.msra.mxu0 0.0
  %1552 = vmatprep.subr.mxu0 0.0
  %1553 = vmatpush1.xpose.msra.mxu0 0.0
  %1554 = vmatprep.subr.mxu0 0.0
  %1555 = vmatpush1.xpose.msra.mxu0 0.0
  %1556 = vmatprep.subr.mxu0 0.0
  %1557 = vmatpush1.xpose.msra.mxu0 0.0
  %1558 = vmatprep.subr.mxu0 0.0
  %1559 = vmatpush1.xpose.msra.mxu0 0.0
  %1560 = vmatprep.subr.mxu0 0.0
  %1561 = vmatpush1.xpose.msra.mxu0 0.0
  %1562 = vmatprep.subr.mxu0 0.0
  %1563 = vmatpush1.xpose.msra.mxu0 0.0
  %1564 = vmatprep.subr.mxu0 0.0
  %1565 = vmatpush1.xpose.msra.mxu0 0.0
  %1566 = vmatprep.subr.mxu0 0.0
  %1567 = vmatpush1.xpose.msra.mxu0 0.0
  %1568 = vmatprep.subr.mxu0 0.0
  %1569 = vmatpush1.xpose.msra.mxu0 0.0
  %1570 = vmatprep.subr.mxu0 0.0
  %1571 = vmatpush1.xpose.msra.mxu0 0.0
  %1572 = vmatprep.subr.mxu0 0.0
  %1573 = vmatpush1.xpose.msra.mxu0 0.0
  %1574 = vmatprep.subr.mxu0 0.0
  %1575 = vmatpush1.xpose.msra.mxu0 0.0
  %1576 = vmatprep.subr.mxu0 0.0
  %1577 = vmatpush1.xpose.msra.mxu0 0.0
  %1578 = vmatprep.subr.mxu0 0.0
  %1579 = vmatpush1.xpose.msra.mxu0 0.0
  %1580 = vmatprep.subr.mxu0 0.0
  %1581 = vmatpush1.xpose.msra.mxu0 0.0
  %1582 = vmatprep.subr.mxu0 0.0
  %1583 = vmatpush1.xpose.msra.mxu0 0.0
  %1584 = vmatprep.subr.mxu0 0.0
  %1585 = vmatpush1.xpose.msra.mxu0 0.0
  %1586 = vmatprep.subr.mxu0 0.0
  %1587 = vmatpush1.xpose.msra.mxu0 0.0
  %1588 = vmatprep.subr.mxu0 0.0
  %1589 = vmatpush1.xpose.msra.mxu0 0.0
  %1590 = vmatprep.subr.mxu0 0.0
  %1591 = vmatpush1.xpose.msra.mxu0 0.0
  %1592 = vmatprep.subr.mxu0 0.0
  %1593 = vmatpush1.xpose.msra.mxu0 0.0
  %1594 = vmatprep.subr.mxu0 0.0
  %1595 = vmatpush1.xpose.msra.mxu0 0.0
  %1596 = vmatprep.subr.mxu0 0.0
  %1597 = vmatpush1.xpose.msra.mxu0 0.0
  %1598 = vmatprep.mubr.f32.mxu0 0.0
  %1599 = vmatmul.mubr.f32.gmra.mrb[0].mxu0 %v1530
  %v1600 = vpop.f32.mrb[0].mxu0
  %v1601 = vadd.f32 0.0, %v1600
  %v1602 = vpop.f32.mrb[0].mxu0
  %1603 = vdwg.mxu0
  %v1604 = vsel %vm216, %v1523, -inf
  %1605 = vmax.xlane.f32.xlu0 %v1604
  %v1606 = vpop.xlane.xlu0 %1605
  %v1607 = vsel %vm216, %v1601, -inf
  %1608 = vmax.xlane.f32.xlu0 %v1607
  %v1609 = vpop.xlane.xlu0 %1608
  %v1610 = vsub.f32 %v1523, %v1606
  %v1611 = vsub.f32 %v1601, %v1609
  %v1612 = vmul.f32 %v1610, 1.442695
  %v1613 = vpow.pop %v1612
  %v1614 = vmul.f32 %v1611, 1.442695
  %v1615 = vpow.pop %v1614
  %v1616 = vsel %vm216, %v1613, 0.0
  %1617 = vadd.xlane.f32.xlu0 %v1616
  %v1618 = vpop.xlane.xlu0 %1617
  %v1619 = vsel %vm216, %v1615, 0.0
  %1620 = vadd.xlane.f32.xlu0 %v1619
  %v1621 = vpop.xlane.xlu0 %1620
  %v1622 = vrcp.pop %v1618
  %v1623 = vrcp.pop %v1621
  %v1624 = vmul.f32 %v1613, %v1622
  %v1625 = vmul.f32 %v1615, %v1623
  %1626 = vrot.lane.b32.xlu0 %v204, 72
  %v1627 = vpop.permute.xlu0 %1626
  %v1630 = vsel %vm216, %v1624, 0
  %1632 = vmatprep.subr.mxu0 0.0
  %1633 = vmatpush1.msra.mxu0 %v1627
  %1634 = vmatprep.subr.mxu0 0.0
  %1635 = vmatpush1.msra.mxu0 0.0
  %1636 = vmatprep.subr.mxu0 0.0
  %1637 = vmatpush1.msra.mxu0 0.0
  %1638 = vmatprep.subr.mxu0 0.0
  %1639 = vmatpush1.msra.mxu0 0.0
  %1640 = vmatprep.subr.mxu0 0.0
  %1641 = vmatpush1.msra.mxu0 0.0
  %1642 = vmatprep.subr.mxu0 0.0
  %1643 = vmatpush1.msra.mxu0 0.0
  %1644 = vmatprep.subr.mxu0 0.0
  %1645 = vmatpush1.msra.mxu0 0.0
  %1646 = vmatprep.subr.mxu0 0.0
  %1647 = vmatpush1.msra.mxu0 0.0
  %1648 = vmatprep.subr.mxu0 0.0
  %1649 = vmatpush1.msra.mxu0 0.0
  %1650 = vmatprep.subr.mxu0 0.0
  %1651 = vmatpush1.msra.mxu0 0.0
  %1652 = vmatprep.subr.mxu0 0.0
  %1653 = vmatpush1.msra.mxu0 0.0
  %1654 = vmatprep.subr.mxu0 0.0
  %1655 = vmatpush1.msra.mxu0 0.0
  %1656 = vmatprep.subr.mxu0 0.0
  %1657 = vmatpush1.msra.mxu0 0.0
  %1658 = vmatprep.subr.mxu0 0.0
  %1659 = vmatpush1.msra.mxu0 0.0
  %1660 = vmatprep.subr.mxu0 0.0
  %1661 = vmatpush1.msra.mxu0 0.0
  %1662 = vmatprep.subr.mxu0 0.0
  %1663 = vmatpush1.msra.mxu0 0.0
  %1664 = vmatprep.subr.mxu0 0.0
  %1665 = vmatpush1.msra.mxu0 0.0
  %1666 = vmatprep.subr.mxu0 0.0
  %1667 = vmatpush1.msra.mxu0 0.0
  %1668 = vmatprep.subr.mxu0 0.0
  %1669 = vmatpush1.msra.mxu0 0.0
  %1670 = vmatprep.subr.mxu0 0.0
  %1671 = vmatpush1.msra.mxu0 0.0
  %1672 = vmatprep.subr.mxu0 0.0
  %1673 = vmatpush1.msra.mxu0 0.0
  %1674 = vmatprep.subr.mxu0 0.0
  %1675 = vmatpush1.msra.mxu0 0.0
  %1676 = vmatprep.subr.mxu0 0.0
  %1677 = vmatpush1.msra.mxu0 0.0
  %1678 = vmatprep.subr.mxu0 0.0
  %1679 = vmatpush1.msra.mxu0 0.0
  %1680 = vmatprep.subr.mxu0 0.0
  %1681 = vmatpush1.msra.mxu0 0.0
  %1682 = vmatprep.subr.mxu0 0.0
  %1683 = vmatpush1.msra.mxu0 0.0
  %1684 = vmatprep.subr.mxu0 0.0
  %1685 = vmatpush1.msra.mxu0 0.0
  %1686 = vmatprep.subr.mxu0 0.0
  %1687 = vmatpush1.msra.mxu0 0.0
  %1688 = vmatprep.subr.mxu0 0.0
  %1689 = vmatpush1.msra.mxu0 0.0
  %1690 = vmatprep.subr.mxu0 0.0
  %1691 = vmatpush1.msra.mxu0 0.0
  %1692 = vmatprep.subr.mxu0 0.0
  %1693 = vmatpush1.msra.mxu0 0.0
  %1694 = vmatprep.subr.mxu0 0.0
  %1695 = vmatpush1.msra.mxu0 0.0
  %1696 = vmatprep.mubr.f32.mxu0 0.0
  %1697 = vmatmul.mubr.f32.gmra.mrb[0].mxu0 %v1630
  %v1698 = vpop.f32.mrb[0].mxu0
  %v1699 = vadd.f32 0.0, %v1698
  %v1700 = vpop.f32.mrb[0].mxu0
  %1701 = vdwg.mxu0
  %1702 = vrot.lane.b32.xlu0 %v209, 72
  %v1703 = vpop.permute.xlu0 %1702
  %v1706 = vsel %vm216, %v1625, 0
  %1708 = vmatprep.subr.mxu0 0.0
  %1709 = vmatpush1.msra.mxu0 %v1703
  %1710 = vmatprep.subr.mxu0 0.0
  %1711 = vmatpush1.msra.mxu0 0.0
  %1712 = vmatprep.subr.mxu0 0.0
  %1713 = vmatpush1.msra.mxu0 0.0
  %1714 = vmatprep.subr.mxu0 0.0
  %1715 = vmatpush1.msra.mxu0 0.0
  %1716 = vmatprep.subr.mxu0 0.0
  %1717 = vmatpush1.msra.mxu0 0.0
  %1718 = vmatprep.subr.mxu0 0.0
  %1719 = vmatpush1.msra.mxu0 0.0
  %1720 = vmatprep.subr.mxu0 0.0
  %1721 = vmatpush1.msra.mxu0 0.0
  %1722 = vmatprep.subr.mxu0 0.0
  %1723 = vmatpush1.msra.mxu0 0.0
  %1724 = vmatprep.subr.mxu0 0.0
  %1725 = vmatpush1.msra.mxu0 0.0
  %1726 = vmatprep.subr.mxu0 0.0
  %1727 = vmatpush1.msra.mxu0 0.0
  %1728 = vmatprep.subr.mxu0 0.0
  %1729 = vmatpush1.msra.mxu0 0.0
  %1730 = vmatprep.subr.mxu0 0.0
  %1731 = vmatpush1.msra.mxu0 0.0
  %1732 = vmatprep.subr.mxu0 0.0
  %1733 = vmatpush1.msra.mxu0 0.0
  %1734 = vmatprep.subr.mxu0 0.0
  %1735 = vmatpush1.msra.mxu0 0.0
  %1736 = vmatprep.subr.mxu0 0.0
  %1737 = vmatpush1.msra.mxu0 0.0
  %1738 = vmatprep.subr.mxu0 0.0
  %1739 = vmatpush1.msra.mxu0 0.0
  %1740 = vmatprep.subr.mxu0 0.0
  %1741 = vmatpush1.msra.mxu0 0.0
  %1742 = vmatprep.subr.mxu0 0.0
  %1743 = vmatpush1.msra.mxu0 0.0
  %1744 = vmatprep.subr.mxu0 0.0
  %1745 = vmatpush1.msra.mxu0 0.0
  %1746 = vmatprep.subr.mxu0 0.0
  %1747 = vmatpush1.msra.mxu0 0.0
  %1748 = vmatprep.subr.mxu0 0.0
  %1749 = vmatpush1.msra.mxu0 0.0
  %1750 = vmatprep.subr.mxu0 0.0
  %1751 = vmatpush1.msra.mxu0 0.0
  %1752 = vmatprep.subr.mxu0 0.0
  %1753 = vmatpush1.msra.mxu0 0.0
  %1754 = vmatprep.subr.mxu0 0.0
  %1755 = vmatpush1.msra.mxu0 0.0
  %1756 = vmatprep.subr.mxu0 0.0
  %1757 = vmatpush1.msra.mxu0 0.0
  %1758 = vmatprep.subr.mxu0 0.0
  %1759 = vmatpush1.msra.mxu0 0.0
  %1760 = vmatprep.subr.mxu0 0.0
  %1761 = vmatpush1.msra.mxu0 0.0
  %1762 = vmatprep.subr.mxu0 0.0
  %1763 = vmatpush1.msra.mxu0 0.0
  %1764 = vmatprep.subr.mxu0 0.0
  %1765 = vmatpush1.msra.mxu0 0.0
  %1766 = vmatprep.subr.mxu0 0.0
  %1767 = vmatpush1.msra.mxu0 0.0
  %1768 = vmatprep.subr.mxu0 0.0
  %1769 = vmatpush1.msra.mxu0 0.0
  %1770 = vmatprep.subr.mxu0 0.0
  %1771 = vmatpush1.msra.mxu0 0.0
  %1772 = vmatprep.mubr.f32.mxu0 0.0
  %1773 = vmatmul.mubr.f32.gmra.mrb[0].mxu0 %v1706
  %v1774 = vpop.f32.mrb[0].mxu0
  %v1775 = vadd.f32 0.0, %v1774
  %v1776 = vpop.f32.mrb[0].mxu0
  %1777 = vdwg.mxu0
  %v1779 = vsel %vm216, %v1699, 0
  %v1782 = vsel %vm216, %v1775, 0
  %1784 = vmatprep.subr.mxu0 0.0
  %1785 = vmatpush1.msra.mxu0 %v215
  %1786 = vmatprep.subr.mxu0 0.0
  %1787 = vmatpush1.msra.mxu0 0.0
  %1788 = vmatprep.subr.mxu0 0.0
  %1789 = vmatpush1.msra.mxu0 0.0
  %1790 = vmatprep.subr.mxu0 0.0
  %1791 = vmatpush1.msra.mxu0 0.0
  %1792 = vmatprep.subr.mxu0 0.0
  %1793 = vmatpush1.msra.mxu0 0.0
  %1794 = vmatprep.subr.mxu0 0.0
  %1795 = vmatpush1.msra.mxu0 0.0
  %1796 = vmatprep.subr.mxu0 0.0
  %1797 = vmatpush1.msra.mxu0 0.0
  %1798 = vmatprep.subr.mxu0 0.0
  %1799 = vmatpush1.msra.mxu0 0.0
  %1800 = vmatprep.subr.mxu0 0.0
  %1801 = vmatpush1.msra.mxu0 0.0
  %1802 = vmatprep.subr.mxu0 0.0
  %1803 = vmatpush1.msra.mxu0 0.0
  %1804 = vmatprep.subr.mxu0 0.0
  %1805 = vmatpush1.msra.mxu0 0.0
  %1806 = vmatprep.subr.mxu0 0.0
  %1807 = vmatpush1.msra.mxu0 0.0
  %1808 = vmatprep.subr.mxu0 0.0
  %1809 = vmatpush1.msra.mxu0 0.0
  %1810 = vmatprep.subr.mxu0 0.0
  %1811 = vmatpush1.msra.mxu0 0.0
  %1812 = vmatprep.subr.mxu0 0.0
  %1813 = vmatpush1.msra.mxu0 0.0
  %1814 = vmatprep.subr.mxu0 0.0
  %1815 = vmatpush1.msra.mxu0 0.0
  %1816 = vmatprep.subr.mxu0 0.0
  %1817 = vmatpush1.msra.mxu0 0.0
  %1818 = vmatprep.subr.mxu0 0.0
  %1819 = vmatpush1.msra.mxu0 0.0
  %1820 = vmatprep.subr.mxu0 0.0
  %1821 = vmatpush1.msra.mxu0 0.0
  %1822 = vmatprep.subr.mxu0 0.0
  %1823 = vmatpush1.msra.mxu0 0.0
  %1824 = vmatprep.subr.mxu0 0.0
  %1825 = vmatpush1.msra.mxu0 0.0
  %1826 = vmatprep.subr.mxu0 0.0
  %1827 = vmatpush1.msra.mxu0 0.0
  %1828 = vmatprep.subr.mxu0 0.0
  %1829 = vmatpush1.msra.mxu0 0.0
  %1830 = vmatprep.subr.mxu0 0.0
  %1831 = vmatpush1.msra.mxu0 0.0
  %1832 = vmatprep.subr.mxu0 0.0
  %1833 = vmatpush1.msra.mxu0 0.0
  %1834 = vmatprep.subr.mxu0 0.0
  %1835 = vmatpush1.msra.mxu0 0.0
  %1836 = vmatprep.subr.mxu0 0.0
  %1837 = vmatpush1.msra.mxu0 0.0
  %1838 = vmatprep.subr.mxu0 0.0
  %1839 = vmatpush1.msra.mxu0 0.0
  %1840 = vmatprep.subr.mxu0 0.0
  %1841 = vmatpush1.msra.mxu0 0.0
  %1842 = vmatprep.subr.mxu0 0.0
  %1843 = vmatpush1.msra.mxu0 0.0
  %1844 = vmatprep.subr.mxu0 0.0
  %1845 = vmatpush1.msra.mxu0 0.0
  %1846 = vmatprep.subr.mxu0 0.0
  %1847 = vmatpush1.msra.mxu0 0.0
  %1848 = vmatprep.mubr.f32.mxu0 0.0
  %1849 = vmatmul.mubr.f32.gmra.mrb[0].mxu0 %v1779
  %v1850 = vpop.f32.mrb[0].mxu0
  %v1851 = vadd.f32 0.0, %v1850
  %v1852 = vpop.f32.mrb[0].mxu0
  %1853 = vmatprep.mubr.f32.mxu0 0.0
  %1854 = vmatmul.mubr.f32.gmra.mrb[0].mxu0 %v1782
  %v1855 = vpop.f32.mrb[0].mxu0
  %v1856 = vadd.f32 0.0, %v1855
  %v1857 = vpop.f32.mrb[0].mxu0
  %1858 = vdwg.mxu0
  %v1859 = vadd.f32 %v1446, %v1851
  %v1860 = vadd.f32 %v1447, %v1856
  %v1861 = vld [vmem:[%s6 + $0x1] sm:$0x1]
  %v1862 = vlaneseq
  %v1863 = vshrl.u32 %v1862, 7
  %v1864 = vsub.s32 0, %v1863
  %v1865 = vrot.slane %v1861, %v1864
  %v1866 = vadd.f32 %v1859, %v1865
  %v1867 = vadd.f32 %v1860, %v1865
  %v1868 = vadd.f32 %v26, %v1866
  %v1869 = vadd.f32 %v27, %v1867
  %v1870 = vld [vmem:[%s6 + $0x2] sm:$0x1]
  %v1871 = vld [vmem:[%s6 + $0x3] sm:$0x1]
  %v1872 = vsel %vm39, %v1868, 0.0
  %1873 = vadd.xlane.f32.xlu0 %v1872
  %v1874 = vpop.xlane.xlu0 %1873
  %v1875 = vsel %vm39, %v1869, 0.0
  %1876 = vadd.xlane.f32.xlu0 %v1875
  %v1877 = vpop.xlane.xlu0 %1876
  %v1878 = vrcp.pop 32.0
  %v1879 = vmul.f32 %v1874, %v1878
  %v1880 = vmul.f32 %v1877, %v1878
  %v1881 = vsub.f32 %v1868, %v1879
  %v1882 = vsub.f32 %v1869, %v1880
  %v1883 = vmul.f32 %v1881, %v1881
  %v1884 = vmul.f32 %v1882, %v1882
  %v1885 = vsel %vm39, %v1883, 0.0
  %1886 = vadd.xlane.f32.xlu0 %v1885
  %v1887 = vpop.xlane.xlu0 %1886
  %v1888 = vsel %vm39, %v1884, 0.0
  %1889 = vadd.xlane.f32.xlu0 %v1888
  %v1890 = vpop.xlane.xlu0 %1889
  %v1891 = vmul.f32 %v1887, %v1878
  %v1892 = vmul.f32 %v1890, %v1878
  %v1893 = vadd.f32 %v1891, 1e-05
  %v1894 = vadd.f32 %v1892, 1e-05
  %v1895 = vrsqrt.pop %v1893
  %v1896 = vrsqrt.pop %v1894
  %v1897 = vmul.f32 %v1881, %v1895
  %v1898 = vmul.f32 %v1882, %v1896
  %v1899 = vlaneseq
  %v1900 = vshrl.u32 %v1899, 7
  %v1901 = vsub.s32 0, %v1900
  %v1902 = vrot.slane %v1870, %v1901
  %v1903 = vmul.f32 %v1897, %v1902
  %v1904 = vmul.f32 %v1898, %v1902
  %v1905 = vlaneseq
  %v1906 = vshrl.u32 %v1905, 7
  %v1907 = vsub.s32 0, %v1906
  %v1908 = vrot.slane %v1871, %v1907
  %v1909 = vadd.f32 %v1903, %v1908
  %v1910 = vadd.f32 %v1904, %v1908
  %v1911 = vadd.f32 %v1909, %v1909
  %v1912 = vadd.f32 %v1910, %v1910
  %v1913 = vld [vmem:[%s6 + $0x4] sm:$0x1]
  %v1914 = vld [vmem:[%s6 + $0x5] sm:$0x1]
  %v1915 = vsel %vm39, %v1911, 0.0
  %1916 = vadd.xlane.f32.xlu0 %v1915
  %v1917 = vpop.xlane.xlu0 %1916
  %v1918 = vsel %vm39, %v1912, 0.0
  %1919 = vadd.xlane.f32.xlu0 %v1918
  %v1920 = vpop.xlane.xlu0 %1919
  %v1921 = vmul.f32 %v1917, %v1878
  %v1922 = vmul.f32 %v1920, %v1878
  %v1923 = vsub.f32 %v1911, %v1921
  %v1924 = vsub.f32 %v1912, %v1922
  %v1925 = vmul.f32 %v1923, %v1923
  %v1926 = vmul.f32 %v1924, %v1924
  %v1927 = vsel %vm39, %v1925, 0.0
  %1928 = vadd.xlane.f32.xlu0 %v1927
  %v1929 = vpop.xlane.xlu0 %1928
  %v1930 = vsel %vm39, %v1926, 0.0
  %1931 = vadd.xlane.f32.xlu0 %v1930
  %v1932 = vpop.xlane.xlu0 %1931
  %v1933 = vmul.f32 %v1929, %v1878
  %v1934 = vmul.f32 %v1932, %v1878
  %v1935 = vadd.f32 %v1933, 1e-05
  %v1936 = vadd.f32 %v1934, 1e-05
  %v1937 = vrsqrt.pop %v1935
  %v1938 = vrsqrt.pop %v1936
  %v1939 = vmul.f32 %v1923, %v1937
  %v1940 = vmul.f32 %v1924, %v1938
  %v1941 = vlaneseq
  %v1942 = vshrl.u32 %v1941, 7
  %v1943 = vsub.s32 0, %v1942
  %v1944 = vrot.slane %v1913, %v1943
  %v1945 = vmul.f32 %v1939, %v1944
  %v1946 = vmul.f32 %v1940, %v1944
  %v1947 = vlaneseq
  %v1948 = vshrl.u32 %v1947, 7
  %v1949 = vsub.s32 0, %v1948
  %v1950 = vrot.slane %v1914, %v1949
  %v1951 = vadd.f32 %v1945, %v1950
  %v1952 = vadd.f32 %v1946, %v1950
  %1953 = vst.msk [vmem:[%s7] sm:$0xff] %vm39, %v1951
  %1954 = vst.msk [vmem:[%s7 + $0x8] sm:$0xff] %vm39, %v1952
  // Predicated region
  $region30: #{attention_forward.1} parent=0 // pred_check
    _
  $region31: #{attention_forward.1} parent=0 // pred_check_branch
    %1956 = sbr.rel (0) target = $region33
  $region32: #{attention_forward.1} parent=0 // pred_region
    _
  $region33: #{attention_forward.1} parent=0 // pred_fallthru
    _
  // Predicated region
  $region34: #{attention_forward.1} parent=0 // pred_check
    _
  $region35: #{attention_forward.1} parent=0 // pred_check_branch
    %1958 = sbr.rel (0) target = $region37
  $region36: #{attention_forward.1} parent=0 // pred_region
    _
  $region37: #{attention_forward.1} parent=0 // pred_fallthru
    _

</llo_original>
